<compile_context>
chip_gen: v6e
topology: v6e:2x2x1
jax: 0.10.0
libtpu: 0.0.40
codegen_flags: <defaults>
</compile_context>

<pallas_src>
import jax
import jax.numpy as jnp
from jax import lax
from jax.experimental import pallas as pl
from jax.experimental.pallas import tpu as pltpu

EPS = 1e-5


# --------------------------------------------------------------------------
# Wrapper-side weight transform: fold the 3 kw taps + W zero padding into a
# banded matrix per kh, then stack the 3 kh mats along K.
# Result shape: (3 * W * Cin, W * Cout).
# --------------------------------------------------------------------------
def _conv_as_banded_stacked(w_oihw, W, dtype):
    Cout, Cin, KH, KW = w_oihw.shape
    wk = jnp.transpose(w_oihw, (2, 3, 1, 0)).astype(jnp.float32)  # (kh,kw,Cin,Cout)
    mats = []
    for kh in range(KH):
        t = jnp.zeros((W * Cin, W * Cout), jnp.float32)
        for kw in range(KW):
            # input column w_in = w_out + kw - 1 ; out-of-range taps fall off the eye
            band = jnp.eye(W, W, k=1 - kw, dtype=jnp.float32)
            t = t + jnp.kron(band, wk[kh, kw])
        mats.append(t)
    return jnp.concatenate(mats, axis=0).astype(dtype)            # (3*W*Cin, W*Cout)


def _padded_cin(Cin, W):
    """Smallest Cin' >= Cin making W*Cin' lane-dense (multiple of 128)."""
    lanes = W * Cin
    if lanes % 128 == 0:
        return Cin
    if 128 % W == 0:
        return max(Cin, (-(-lanes // 128)) * 128 // W)
    # TODO(synk): handle W not dividing 128 (pad W instead of Cin).
    return Cin


# --------------------------------------------------------------------------
# Fused kernel: conv1 -> BN1 -> ReLU -> conv2 -> BN2 -> ReLU, all in VMEM.
# --------------------------------------------------------------------------
def _make_double_conv_kernel(B, H, W, Cin_p, Cout):
    M = float(B * H * W)          # elements per channel for BN batch stats
    WC = W * Cout

    def kernel(x_ref, t1_ref, g1_ref, be1_ref, t2_ref, g2_ref, be2_ref,
               sel_ref, selt_ref, o_ref):
        sel = sel_ref[...]        # (W*Cout, Cout): strided-lane -> per-channel reduce
        selt = selt_ref[...]      # (Cout, W*Cout): per-channel -> lane-dense broadcast

        def conv_bn_relu(x3d, t_ref, g_ref, be_ref):
            # x3d: (B, H, K) in compute dtype; t_ref: (3*K, W*Cout).
            k = x3d.shape[-1]
            # 1-row zero H halo per batch, built as a value (no scratch refs,
            # no full-slab zero-fill store/load round trip).
            z = jnp.zeros((B, 1, k), x3d.dtype)
            xp = jnp.concatenate([z, x3d, z], axis=1)              # (B, H+2, K)
            # im2row along kh only (kw + W padding are folded into t): one
            # stacked-K slab -> ONE MXU GEMM per conv block.
            slab = jnp.concatenate(
                [xp[:, 0:H, :], xp[:, 1:H + 1, :], xp[:, 2:H + 2, :]],
                axis=-1).reshape(B * H, 3 * k)                     # (B*H, 3K)
            acc = jnp.dot(slab, t_ref[...],
                          preferred_element_type=jnp.float32)      # (B*H, WC) f32

            # ---- BatchNorm2d: training batch stats (biased var), one pass.
            #      (no conv bias needed: it cancels under mean subtraction)
            col = jnp.concatenate(
                [jnp.sum(acc, axis=0, keepdims=True),
                 jnp.sum(acc * acc, axis=0, keepdims=True)], axis=0)  # (2, WC)
            stats = jnp.dot(col, sel,
                            preferred_element_type=jnp.float32)       # (2, Cout)
            mean = stats[0:1, :] * (1.0 / M)
            var = stats[1:2, :] * (1.0 / M) - mean * mean
            scale = g_ref[...] * lax.rsqrt(var + EPS)                  # (1, Cout)
            shift = be_ref[...] - mean * scale
            ss = jnp.dot(jnp.concatenate([scale, shift], axis=0), selt,
                         preferred_element_type=jnp.float32)           # (2, WC)

            # ---- affine + ReLU, lane-dense, f32 elementwise (v5e-safe) ----
            return jnp.maximum(acc * ss[0:1, :] + ss[1:2, :], 0.0)     # (B*H, WC)

        # Block 1.
        h = conv_bn_relu(x_ref[...], t1_ref, g1_ref, be1_ref)
        # Block 2: intermediate stays on-core; cast to compute dtype for the GEMM.
        h = h.astype(t2_ref.dtype).reshape(B, H, WC)
        o_ref[...] = conv_bn_relu(h, t2_ref, g2_ref, be2_ref)

    return kernel


def double_conv(x_nchw, params, compute_dtype=jnp.bfloat16):
    """Full Double_Conv forward. Input/output are NCHW f32 to match PyTorch."""
    (w1, _b1, g1, be1, w2, _b2, g2, be2) = params   # conv biases cancel under BN
    B, Cin, H, W = x_nchw.shape
    Cout = w1.shape[0]
    WC = W * Cout

    # Pad Cin so W*Cin is lane-dense (128-multiple): unmasked vld/vst, full-K GEMM.
    Cin_p = _padded_cin(Cin, W)
    if Cin_p != Cin:
        x_nchw = jnp.concatenate(
            [x_nchw, jnp.zeros((B, Cin_p - Cin, H, W), x_nchw.dtype)], axis=1)
        w1 = jnp.concatenate(
            [w1, jnp.zeros((Cout, Cin_p - Cin, 3, 3), w1.dtype)], axis=1)

    # Glue: NCHW -> lane-dense rows (B, H, W*Cin_p).
    x_rows = jnp.transpose(x_nchw, (0, 2, 3, 1)).reshape(B, H, W * Cin_p)
    x_rows = x_rows.astype(compute_dtype)

    t1 = _conv_as_banded_stacked(w1, W, compute_dtype)   # (3*W*Cin_p, W*Cout)
    t2 = _conv_as_banded_stacked(w2, W, compute_dtype)   # (3*W*Cout,  W*Cout)
    g1_r = g1.reshape(1, Cout).astype(jnp.float32)
    be1_r = be1.reshape(1, Cout).astype(jnp.float32)
    g2_r = g2.reshape(1, Cout).astype(jnp.float32)
    be2_r = be2.reshape(1, Cout).astype(jnp.float32)
    sel = jnp.tile(jnp.eye(Cout, dtype=jnp.float32), (W, 1))   # (W*Cout, Cout)
    selt = sel.T                                                # (Cout, W*Cout)

    kernel = _make_double_conv_kernel(B, H, W, Cin_p, Cout)
    vmem = pl.BlockSpec(memory_space=pltpu.MemorySpace.VMEM)

    out2d = pl.pallas_call(
        kernel,
        out_shape=jax.ShapeDtypeStruct((B * H, WC), jnp.float32),
        in_specs=[vmem] * 9,
        out_specs=vmem,
    )(x_rows, t1, g1_r, be1_r, t2, g2_r, be2_r, sel, selt)

    # Glue: (B*H, W*Cout) -> NCHW.
    return jnp.transpose(out2d.reshape(B, H, W, Cout), (0, 3, 1, 2))


double_conv = jax.jit(double_conv, static_argnames=("compute_dtype",))


# -------------------- pure-JAX reference (for verification) --------------------
def _ref_block(x, w, b, g, be):
    y = lax.conv_general_dilated(
        x, w, window_strides=(1, 1), padding="SAME",
        dimension_numbers=("NCHW", "OIHW", "NCHW"))
    y = y + b[None, :, None, None]
    mean = jnp.mean(y, axis=(0, 2, 3), keepdims=True)
    var = jnp.mean((y - mean) ** 2, axis=(0, 2, 3), keepdims=True)
    y = (y - mean) / jnp.sqrt(var + EPS)
    y = y * g[None, :, None, None] + be[None, :, None, None]
    return jnp.maximum(y, 0.0)


def double_conv_ref(x_nchw, params):
    (w1, b1, g1, be1, w2, b2, g2, be2) = params
    h = _ref_block(x_nchw, w1, b1, g1, be1)
    return _ref_block(h, w2, b2, g2, be2)


if __name__ == "__main__":
    B, Cin, Cout, H, W = 2, 4, 8, 16, 16

    key = jax.random.PRNGKey(0)
    kx, kw1, kb1, kw2, kb2 = jax.random.split(key, 5)

    x = jax.random.normal(kx, (B, Cin, H, W), dtype=jnp.float32)

    # Deterministic parameter init (Conv2d-style fan-in scaling; BN defaults).
    fan1 = Cin * 9
    w1 = jax.random.uniform(kw1, (Cout, Cin, 3, 3), jnp.float32,
                            -1.0 / fan1 ** 0.5, 1.0 / fan1 ** 0.5)
    b1 = jax.random.uniform(kb1, (Cout,), jnp.float32,
                            -1.0 / fan1 ** 0.5, 1.0 / fan1 ** 0.5)
    g1 = jnp.ones((Cout,), jnp.float32)
    be1 = jnp.zeros((Cout,), jnp.float32)

    fan2 = Cout * 9
    w2 = jax.random.uniform(kw2, (Cout, Cout, 3, 3), jnp.float32,
                            -1.0 / fan2 ** 0.5, 1.0 / fan2 ** 0.5)
    b2 = jax.random.uniform(kb2, (Cout,), jnp.float32,
                            -1.0 / fan2 ** 0.5, 1.0 / fan2 ** 0.5)
    g2 = jnp.ones((Cout,), jnp.float32)
    be2 = jnp.zeros((Cout,), jnp.float32)

    params = (w1, b1, g1, be1, w2, b2, g2, be2)

    ref = jax.block_until_ready(double_conv_ref(x, params))

    # 1) Semantic check: exact-f32 compute path vs faithful reference (tight tol).
    out_f32 = jax.block_until_ready(
        double_conv(x, params, compute_dtype=jnp.float32))
    assert out_f32.shape == (B, Cout, H, W), out_f32.shape
    assert jnp.allclose(out_f32, ref, atol=1e-3, rtol=1e-3), (
        float(jnp.max(jnp.abs(out_f32 - ref))))

    # 2) Perf path (bf16 MXU inputs, f32 accumulation) vs f32 reference: loose
    #    tolerance appropriate for bf16-quantized activations/weights.
    out_bf16 = jax.block_until_ready(
        double_conv(x, params, compute_dtype=jnp.bfloat16))
    assert out_bf16.shape == (B, Cout, H, W), out_bf16.shape
    assert jnp.allclose(out_bf16, ref, atol=6e-2, rtol=6e-2), (
        float(jnp.max(jnp.abs(out_bf16 - ref))))

    print("KERNEL_OK")
</pallas_src>

<mosaic_0001>
module attributes {stable_mosaic.version = 11 : i64} {
  func.func @kernel(%arg0: memref<2x16x128xf32, #tpu.memory_space<vmem>>, %arg1: memref<384x128xf32, #tpu.memory_space<vmem>>, %arg2: memref<1x8xf32, #tpu.memory_space<vmem>>, %arg3: memref<1x8xf32, #tpu.memory_space<vmem>>, %arg4: memref<384x128xf32, #tpu.memory_space<vmem>>, %arg5: memref<1x8xf32, #tpu.memory_space<vmem>>, %arg6: memref<1x8xf32, #tpu.memory_space<vmem>>, %arg7: memref<128x8xf32, #tpu.memory_space<vmem>>, %arg8: memref<8x128xf32, #tpu.memory_space<vmem>>, %arg9: memref<32x128xf32, #tpu.memory_space<vmem>>) attributes {dimension_semantics = [], scalar_prefetch = 0 : i64, scratch_operands = 0 : i64, tpu.core_type = #tpu.core_type<tc>} {
    %c0 = arith.constant 0 : index
    %c0_0 = arith.constant 0 : index
    %0 = vector.load %arg7[%c0, %c0_0] : memref<128x8xf32, #tpu.memory_space<vmem>>, vector<128x8xf32>
    %c0_1 = arith.constant 0 : index
    %c0_2 = arith.constant 0 : index
    %1 = vector.load %arg8[%c0_1, %c0_2] : memref<8x128xf32, #tpu.memory_space<vmem>>, vector<8x128xf32>
    %c0_3 = arith.constant 0 : index
    %c0_4 = arith.constant 0 : index
    %c0_5 = arith.constant 0 : index
    %2 = vector.load %arg0[%c0_3, %c0_4, %c0_5] : memref<2x16x128xf32, #tpu.memory_space<vmem>>, vector<2x16x128xf32>
    %cst = arith.constant 0.000000e+00 : f32
    %3 = vector.broadcast %cst : f32 to vector<2x1x128xf32>
    %4 = tpu.concatenate %3, %2, %3 in 1 : vector<2x1x128xf32>, vector<2x16x128xf32>, vector<2x1x128xf32> -> vector<2x18x128xf32>
    %5 = vector.extract_strided_slice %4 {offsets = [0, 0, 0], sizes = [2, 16, 128], strides = [1, 1, 1]} : vector<2x18x128xf32> to vector<2x16x128xf32>
    %6 = vector.extract_strided_slice %4 {offsets = [0, 1, 0], sizes = [2, 16, 128], strides = [1, 1, 1]} : vector<2x18x128xf32> to vector<2x16x128xf32>
    %7 = vector.extract_strided_slice %4 {offsets = [0, 2, 0], sizes = [2, 16, 128], strides = [1, 1, 1]} : vector<2x18x128xf32> to vector<2x16x128xf32>
    %8 = tpu.concatenate %5, %6, %7 in 2 : vector<2x16x128xf32>, vector<2x16x128xf32>, vector<2x16x128xf32> -> vector<2x16x384xf32>
    %9 = vector.shape_cast %8 : vector<2x16x384xf32> to vector<32x384xf32>
    %c0_6 = arith.constant 0 : index
    %c0_7 = arith.constant 0 : index
    %10 = vector.load %arg1[%c0_6, %c0_7] : memref<384x128xf32, #tpu.memory_space<vmem>>, vector<384x128xf32>
    %cst_8 = arith.constant dense<0.000000e+00> : vector<32x128xf32>
    %11 = tpu.matmul %9, %10, %cst_8 {dimension_numbers = #tpu.dot_dimension_numbers<[1], [0], [0], [1], [0, 0, 1, 1], [], []>} : vector<32x384xf32>, vector<384x128xf32>, vector<32x128xf32> -> vector<32x128xf32>
    %cst_9 = arith.constant dense<0.000000e+00> : vector<128xf32>
    %12 = vector.multi_reduction <add>, %11, %cst_9 [0] : vector<32x128xf32> to vector<128xf32>
    %13 = vector.shape_cast %12 : vector<128xf32> to vector<1x128xf32>
    %14 = arith.mulf %11, %11 : vector<32x128xf32>
    %cst_10 = arith.constant dense<0.000000e+00> : vector<128xf32>
    %15 = vector.multi_reduction <add>, %14, %cst_10 [0] : vector<32x128xf32> to vector<128xf32>
    %16 = vector.shape_cast %15 : vector<128xf32> to vector<1x128xf32>
    %17 = tpu.concatenate %13, %16 in 0 : vector<1x128xf32>, vector<1x128xf32> -> vector<2x128xf32>
    %cst_11 = arith.constant dense<0.000000e+00> : vector<2x8xf32>
    %18 = tpu.matmul %17, %0, %cst_11 {dimension_numbers = #tpu.dot_dimension_numbers<[1], [0], [0], [1], [0, 0, 1, 1], [], []>} : vector<2x128xf32>, vector<128x8xf32>, vector<2x8xf32> -> vector<2x8xf32>
    %19 = vector.extract_strided_slice %18 {offsets = [0, 0], sizes = [1, 8], strides = [1, 1]} : vector<2x8xf32> to vector<1x8xf32>
    %cst_12 = arith.constant 0.001953125 : f32
    %20 = vector.broadcast %cst_12 : f32 to vector<1x8xf32>
    %21 = arith.mulf %19, %20 : vector<1x8xf32>
    %22 = vector.extract_strided_slice %18 {offsets = [1, 0], sizes = [1, 8], strides = [1, 1]} : vector<2x8xf32> to vector<1x8xf32>
    %cst_13 = arith.constant 0.001953125 : f32
    %23 = vector.broadcast %cst_13 : f32 to vector<1x8xf32>
    %24 = arith.mulf %22, %23 : vector<1x8xf32>
    %25 = arith.mulf %21, %21 : vector<1x8xf32>
    %26 = arith.subf %24, %25 : vector<1x8xf32>
    %c0_14 = arith.constant 0 : index
    %c0_15 = arith.constant 0 : index
    %27 = vector.load %arg2[%c0_14, %c0_15] : memref<1x8xf32, #tpu.memory_space<vmem>>, vector<1x8xf32>
    %cst_16 = arith.constant 9.99999974E-6 : f32
    %28 = vector.broadcast %cst_16 : f32 to vector<1x8xf32>
    %29 = arith.addf %26, %28 : vector<1x8xf32>
    %30 = math.rsqrt %29 : vector<1x8xf32>
    %31 = arith.mulf %27, %30 : vector<1x8xf32>
    %c0_17 = arith.constant 0 : index
    %c0_18 = arith.constant 0 : index
    %32 = vector.load %arg3[%c0_17, %c0_18] : memref<1x8xf32, #tpu.memory_space<vmem>>, vector<1x8xf32>
    %33 = arith.mulf %21, %31 : vector<1x8xf32>
    %34 = arith.subf %32, %33 : vector<1x8xf32>
    %35 = tpu.concatenate %31, %34 in 0 : vector<1x8xf32>, vector<1x8xf32> -> vector<2x8xf32>
    %cst_19 = arith.constant dense<0.000000e+00> : vector<2x128xf32>
    %36 = tpu.matmul %35, %1, %cst_19 {dimension_numbers = #tpu.dot_dimension_numbers<[1], [0], [0], [1], [0, 0, 1, 1], [], []>} : vector<2x8xf32>, vector<8x128xf32>, vector<2x128xf32> -> vector<2x128xf32>
    %37 = vector.extract_strided_slice %36 {offsets = [0, 0], sizes = [1, 128], strides = [1, 1]} : vector<2x128xf32> to vector<1x128xf32>
    %38 = vector.broadcast %37 : vector<1x128xf32> to vector<32x128xf32>
    %39 = arith.mulf %11, %38 : vector<32x128xf32>
    %40 = vector.extract_strided_slice %36 {offsets = [1, 0], sizes = [1, 128], strides = [1, 1]} : vector<2x128xf32> to vector<1x128xf32>
    %41 = vector.broadcast %40 : vector<1x128xf32> to vector<32x128xf32>
    %42 = arith.addf %39, %41 : vector<32x128xf32>
    %cst_20 = arith.constant 0.000000e+00 : f32
    %43 = vector.broadcast %cst_20 : f32 to vector<32x128xf32>
    %44 = arith.maximumf %42, %43 : vector<32x128xf32>
    %45 = vector.shape_cast %44 : vector<32x128xf32> to vector<2x16x128xf32>
    %cst_21 = arith.constant 0.000000e+00 : f32
    %46 = vector.broadcast %cst_21 : f32 to vector<2x1x128xf32>
    %47 = tpu.concatenate %46, %45, %46 in 1 : vector<2x1x128xf32>, vector<2x16x128xf32>, vector<2x1x128xf32> -> vector<2x18x128xf32>
    %48 = vector.extract_strided_slice %47 {offsets = [0, 0, 0], sizes = [2, 16, 128], strides = [1, 1, 1]} : vector<2x18x128xf32> to vector<2x16x128xf32>
    %49 = vector.extract_strided_slice %47 {offsets = [0, 1, 0], sizes = [2, 16, 128], strides = [1, 1, 1]} : vector<2x18x128xf32> to vector<2x16x128xf32>
    %50 = vector.extract_strided_slice %47 {offsets = [0, 2, 0], sizes = [2, 16, 128], strides = [1, 1, 1]} : vector<2x18x128xf32> to vector<2x16x128xf32>
    %51 = tpu.concatenate %48, %49, %50 in 2 : vector<2x16x128xf32>, vector<2x16x128xf32>, vector<2x16x128xf32> -> vector<2x16x384xf32>
    %52 = vector.shape_cast %51 : vector<2x16x384xf32> to vector<32x384xf32>
    %c0_22 = arith.constant 0 : index
    %c0_23 = arith.constant 0 : index
    %53 = vector.load %arg4[%c0_22, %c0_23] : memref<384x128xf32, #tpu.memory_space<vmem>>, vector<384x128xf32>
    %cst_24 = arith.constant dense<0.000000e+00> : vector<32x128xf32>
    %54 = tpu.matmul %52, %53, %cst_24 {dimension_numbers = #tpu.dot_dimension_numbers<[1], [0], [0], [1], [0, 0, 1, 1], [], []>} : vector<32x384xf32>, vector<384x128xf32>, vector<32x128xf32> -> vector<32x128xf32>
    %cst_25 = arith.constant dense<0.000000e+00> : vector<128xf32>
    %55 = vector.multi_reduction <add>, %54, %cst_25 [0] : vector<32x128xf32> to vector<128xf32>
    %56 = vector.shape_cast %55 : vector<128xf32> to vector<1x128xf32>
    %57 = arith.mulf %54, %54 : vector<32x128xf32>
    %cst_26 = arith.constant dense<0.000000e+00> : vector<128xf32>
    %58 = vector.multi_reduction <add>, %57, %cst_26 [0] : vector<32x128xf32> to vector<128xf32>
    %59 = vector.shape_cast %58 : vector<128xf32> to vector<1x128xf32>
    %60 = tpu.concatenate %56, %59 in 0 : vector<1x128xf32>, vector<1x128xf32> -> vector<2x128xf32>
    %cst_27 = arith.constant dense<0.000000e+00> : vector<2x8xf32>
    %61 = tpu.matmul %60, %0, %cst_27 {dimension_numbers = #tpu.dot_dimension_numbers<[1], [0], [0], [1], [0, 0, 1, 1], [], []>} : vector<2x128xf32>, vector<128x8xf32>, vector<2x8xf32> -> vector<2x8xf32>
    %62 = vector.extract_strided_slice %61 {offsets = [0, 0], sizes = [1, 8], strides = [1, 1]} : vector<2x8xf32> to vector<1x8xf32>
    %cst_28 = arith.constant 0.001953125 : f32
    %63 = vector.broadcast %cst_28 : f32 to vector<1x8xf32>
    %64 = arith.mulf %62, %63 : vector<1x8xf32>
    %65 = vector.extract_strided_slice %61 {offsets = [1, 0], sizes = [1, 8], strides = [1, 1]} : vector<2x8xf32> to vector<1x8xf32>
    %cst_29 = arith.constant 0.001953125 : f32
    %66 = vector.broadcast %cst_29 : f32 to vector<1x8xf32>
    %67 = arith.mulf %65, %66 : vector<1x8xf32>
    %68 = arith.mulf %64, %64 : vector<1x8xf32>
    %69 = arith.subf %67, %68 : vector<1x8xf32>
    %c0_30 = arith.constant 0 : index
    %c0_31 = arith.constant 0 : index
    %70 = vector.load %arg5[%c0_30, %c0_31] : memref<1x8xf32, #tpu.memory_space<vmem>>, vector<1x8xf32>
    %cst_32 = arith.constant 9.99999974E-6 : f32
    %71 = vector.broadcast %cst_32 : f32 to vector<1x8xf32>
    %72 = arith.addf %69, %71 : vector<1x8xf32>
    %73 = math.rsqrt %72 : vector<1x8xf32>
    %74 = arith.mulf %70, %73 : vector<1x8xf32>
    %c0_33 = arith.constant 0 : index
    %c0_34 = arith.constant 0 : index
    %75 = vector.load %arg6[%c0_33, %c0_34] : memref<1x8xf32, #tpu.memory_space<vmem>>, vector<1x8xf32>
    %76 = arith.mulf %64, %74 : vector<1x8xf32>
    %77 = arith.subf %75, %76 : vector<1x8xf32>
    %78 = tpu.concatenate %74, %77 in 0 : vector<1x8xf32>, vector<1x8xf32> -> vector<2x8xf32>
    %cst_35 = arith.constant dense<0.000000e+00> : vector<2x128xf32>
    %79 = tpu.matmul %78, %1, %cst_35 {dimension_numbers = #tpu.dot_dimension_numbers<[1], [0], [0], [1], [0, 0, 1, 1], [], []>} : vector<2x8xf32>, vector<8x128xf32>, vector<2x128xf32> -> vector<2x128xf32>
    %80 = vector.extract_strided_slice %79 {offsets = [0, 0], sizes = [1, 128], strides = [1, 1]} : vector<2x128xf32> to vector<1x128xf32>
    %81 = vector.broadcast %80 : vector<1x128xf32> to vector<32x128xf32>
    %82 = arith.mulf %54, %81 : vector<32x128xf32>
    %83 = vector.extract_strided_slice %79 {offsets = [1, 0], sizes = [1, 128], strides = [1, 1]} : vector<2x128xf32> to vector<1x128xf32>
    %84 = vector.broadcast %83 : vector<1x128xf32> to vector<32x128xf32>
    %85 = arith.addf %82, %84 : vector<32x128xf32>
    %cst_36 = arith.constant 0.000000e+00 : f32
    %86 = vector.broadcast %cst_36 : f32 to vector<32x128xf32>
    %87 = arith.maximumf %85, %86 : vector<32x128xf32>
    %c0_37 = arith.constant 0 : index
    %c0_38 = arith.constant 0 : index
    %88 = vector.load %arg9[%c0_37, %c0_38] : memref<32x128xf32, #tpu.memory_space<vmem>>, vector<32x128xf32>
    tpu.vector_store %arg9[%c0_37, %c0_38], %87 {strides = array<i32>} : memref<32x128xf32, #tpu.memory_space<vmem>>, vector<32x128xf32>,
    return
  }
}

</mosaic_0001>

<llo_original>
// kernel: tile.9
$region0: #{tile.9}
  %s0 = inlined_call_operand.vmem [shape: f32[16,8,8], index: 0, kind: input, shape index: {}]
  %s1 = inlined_call_operand.vmem [shape: f32[128,8], index: 1, kind: output, shape index: {}]
  %s2 = smov 3
  %v3 = vld [vmem:[%s0] ss:$16 sm:%s2]
  %s4 = smov 12
  %v5 = vld [vmem:[%s0] ss:$16 sm:%s4]
  %vm6 = vcmask 1043458
  %v7 = vsel %vm6, %v5, %v3
  %s8 = smov 48
  %v9 = vld [vmem:[%s0] ss:$16 sm:%s8]
  %vm10 = vcmask 1045508
  %v11 = vsel %vm10, %v9, %v7
  %s12 = smov 192
  %v13 = vld [vmem:[%s0] ss:$16 sm:%s12]
  %vm14 = vcmask 1047558
  %v15 = vsel %vm14, %v13, %v11
  %vm16 = vcmask 64512
  %17 = vst.msk [vmem:[%s1] sm:$0xff] %vm16, %v15
  %s18 = scalar_lea.vmem %s0, 15
  %s19 = smov 3
  %v20 = vld [vmem:[%s18] ss:$16 sm:%s19]
  %s21 = scalar_lea.vmem %s0, 15
  %s22 = smov 12
  %v23 = vld [vmem:[%s21] ss:$16 sm:%s22]
  %vm24 = vcmask 1043458
  %v25 = vsel %vm24, %v23, %v20
  %s26 = scalar_lea.vmem %s0, 15
  %s27 = smov 48
  %v28 = vld [vmem:[%s26] ss:$16 sm:%s27]
  %vm29 = vcmask 1045508
  %v30 = vsel %vm29, %v28, %v25
  %s31 = scalar_lea.vmem %s0, 15
  %s32 = smov 192
  %v33 = vld [vmem:[%s31] ss:$16 sm:%s32]
  %vm34 = vcmask 1047558
  %v35 = vsel %vm34, %v33, %v30
  %36 = vrot.lane.b32.xlu0 %v35, 120
  %v37 = vpop.permute.xlu0 %36
  %vm38 = vcmask 1048512
  %39 = vst.msk [vmem:[%s1] sm:$0xff] %vm38, %v37
  %s40 = scalar_lea.vmem %s0, 14
  %s41 = smov 3
  %v42 = vld [vmem:[%s40] ss:$16 sm:%s41]
  %s43 = scalar_lea.vmem %s0, 14
  %s44 = smov 12
  %v45 = vld [vmem:[%s43] ss:$16 sm:%s44]
  %vm46 = vcmask 1043458
  %v47 = vsel %vm46, %v45, %v42
  %s48 = scalar_lea.vmem %s0, 14
  %s49 = smov 48
  %v50 = vld [vmem:[%s48] ss:$16 sm:%s49]
  %vm51 = vcmask 1045508
  %v52 = vsel %vm51, %v50, %v47
  %s53 = scalar_lea.vmem %s0, 14
  %s54 = smov 192
  %v55 = vld [vmem:[%s53] ss:$16 sm:%s54]
  %vm56 = vcmask 1047558
  %v57 = vsel %vm56, %v55, %v52
  %58 = vrot.lane.b32.xlu0 %v57, 112
  %v59 = vpop.permute.xlu0 %58
  %vm60 = vcmask 982912
  %61 = vst.msk [vmem:[%s1] sm:$0xff] %vm60, %v59
  %s62 = scalar_lea.vmem %s0, 13
  %s63 = smov 3
  %v64 = vld [vmem:[%s62] ss:$16 sm:%s63]
  %s65 = scalar_lea.vmem %s0, 13
  %s66 = smov 12
  %v67 = vld [vmem:[%s65] ss:$16 sm:%s66]
  %vm68 = vcmask 1043458
  %v69 = vsel %vm68, %v67, %v64
  %s70 = scalar_lea.vmem %s0, 13
  %s71 = smov 48
  %v72 = vld [vmem:[%s70] ss:$16 sm:%s71]
  %vm73 = vcmask 1045508
  %v74 = vsel %vm73, %v72, %v69
  %s75 = scalar_lea.vmem %s0, 13
  %s76 = smov 192
  %v77 = vld [vmem:[%s75] ss:$16 sm:%s76]
  %vm78 = vcmask 1047558
  %v79 = vsel %vm78, %v77, %v74
  %80 = vrot.lane.b32.xlu0 %v79, 104
  %v81 = vpop.permute.xlu0 %80
  %vm82 = vcmask 917312
  %83 = vst.msk [vmem:[%s1] sm:$0xff] %vm82, %v81
  %s84 = scalar_lea.vmem %s0, 12
  %s85 = smov 3
  %v86 = vld [vmem:[%s84] ss:$16 sm:%s85]
  %s87 = scalar_lea.vmem %s0, 12
  %s88 = smov 12
  %v89 = vld [vmem:[%s87] ss:$16 sm:%s88]
  %vm90 = vcmask 1043458
  %v91 = vsel %vm90, %v89, %v86
  %s92 = scalar_lea.vmem %s0, 12
  %s93 = smov 48
  %v94 = vld [vmem:[%s92] ss:$16 sm:%s93]
  %vm95 = vcmask 1045508
  %v96 = vsel %vm95, %v94, %v91
  %s97 = scalar_lea.vmem %s0, 12
  %s98 = smov 192
  %v99 = vld [vmem:[%s97] ss:$16 sm:%s98]
  %vm100 = vcmask 1047558
  %v101 = vsel %vm100, %v99, %v96
  %102 = vrot.lane.b32.xlu0 %v101, 96
  %v103 = vpop.permute.xlu0 %102
  %vm104 = vcmask 851712
  %105 = vst.msk [vmem:[%s1] sm:$0xff] %vm104, %v103
  %s106 = scalar_lea.vmem %s0, 11
  %s107 = smov 3
  %v108 = vld [vmem:[%s106] ss:$16 sm:%s107]
  %s109 = scalar_lea.vmem %s0, 11
  %s110 = smov 12
  %v111 = vld [vmem:[%s109] ss:$16 sm:%s110]
  %vm112 = vcmask 1043458
  %v113 = vsel %vm112, %v111, %v108
  %s114 = scalar_lea.vmem %s0, 11
  %s115 = smov 48
  %v116 = vld [vmem:[%s114] ss:$16 sm:%s115]
  %vm117 = vcmask 1045508
  %v118 = vsel %vm117, %v116, %v113
  %s119 = scalar_lea.vmem %s0, 11
  %s120 = smov 192
  %v121 = vld [vmem:[%s119] ss:$16 sm:%s120]
  %vm122 = vcmask 1047558
  %v123 = vsel %vm122, %v121, %v118
  %124 = vrot.lane.b32.xlu0 %v123, 88
  %v125 = vpop.permute.xlu0 %124
  %vm126 = vcmask 786112
  %127 = vst.msk [vmem:[%s1] sm:$0xff] %vm126, %v125
  %s128 = scalar_lea.vmem %s0, 10
  %s129 = smov 3
  %v130 = vld [vmem:[%s128] ss:$16 sm:%s129]
  %s131 = scalar_lea.vmem %s0, 10
  %s132 = smov 12
  %v133 = vld [vmem:[%s131] ss:$16 sm:%s132]
  %vm134 = vcmask 1043458
  %v135 = vsel %vm134, %v133, %v130
  %s136 = scalar_lea.vmem %s0, 10
  %s137 = smov 48
  %v138 = vld [vmem:[%s136] ss:$16 sm:%s137]
  %vm139 = vcmask 1045508
  %v140 = vsel %vm139, %v138, %v135
  %s141 = scalar_lea.vmem %s0, 10
  %s142 = smov 192
  %v143 = vld [vmem:[%s141] ss:$16 sm:%s142]
  %vm144 = vcmask 1047558
  %v145 = vsel %vm144, %v143, %v140
  %146 = vrot.lane.b32.xlu0 %v145, 80
  %v147 = vpop.permute.xlu0 %146
  %vm148 = vcmask 720512
  %149 = vst.msk [vmem:[%s1] sm:$0xff] %vm148, %v147
  %s150 = scalar_lea.vmem %s0, 9
  %s151 = smov 3
  %v152 = vld [vmem:[%s150] ss:$16 sm:%s151]
  %s153 = scalar_lea.vmem %s0, 9
  %s154 = smov 12
  %v155 = vld [vmem:[%s153] ss:$16 sm:%s154]
  %vm156 = vcmask 1043458
  %v157 = vsel %vm156, %v155, %v152
  %s158 = scalar_lea.vmem %s0, 9
  %s159 = smov 48
  %v160 = vld [vmem:[%s158] ss:$16 sm:%s159]
  %vm161 = vcmask 1045508
  %v162 = vsel %vm161, %v160, %v157
  %s163 = scalar_lea.vmem %s0, 9
  %s164 = smov 192
  %v165 = vld [vmem:[%s163] ss:$16 sm:%s164]
  %vm166 = vcmask 1047558
  %v167 = vsel %vm166, %v165, %v162
  %168 = vrot.lane.b32.xlu0 %v167, 72
  %v169 = vpop.permute.xlu0 %168
  %vm170 = vcmask 654912
  %171 = vst.msk [vmem:[%s1] sm:$0xff] %vm170, %v169
  %s172 = scalar_lea.vmem %s0, 8
  %s173 = smov 3
  %v174 = vld [vmem:[%s172] ss:$16 sm:%s173]
  %s175 = scalar_lea.vmem %s0, 8
  %s176 = smov 12
  %v177 = vld [vmem:[%s175] ss:$16 sm:%s176]
  %vm178 = vcmask 1043458
  %v179 = vsel %vm178, %v177, %v174
  %s180 = scalar_lea.vmem %s0, 8
  %s181 = smov 48
  %v182 = vld [vmem:[%s180] ss:$16 sm:%s181]
  %vm183 = vcmask 1045508
  %v184 = vsel %vm183, %v182, %v179
  %s185 = scalar_lea.vmem %s0, 8
  %s186 = smov 192
  %v187 = vld [vmem:[%s185] ss:$16 sm:%s186]
  %vm188 = vcmask 1047558
  %v189 = vsel %vm188, %v187, %v184
  %190 = vrot.lane.b32.xlu0 %v189, 64
  %v191 = vpop.permute.xlu0 %190
  %vm192 = vcmask 589312
  %193 = vst.msk [vmem:[%s1] sm:$0xff] %vm192, %v191
  %s194 = scalar_lea.vmem %s0, 7
  %s195 = smov 3
  %v196 = vld [vmem:[%s194] ss:$16 sm:%s195]
  %s197 = scalar_lea.vmem %s0, 7
  %s198 = smov 12
  %v199 = vld [vmem:[%s197] ss:$16 sm:%s198]
  %vm200 = vcmask 1043458
  %v201 = vsel %vm200, %v199, %v196
  %s202 = scalar_lea.vmem %s0, 7
  %s203 = smov 48
  %v204 = vld [vmem:[%s202] ss:$16 sm:%s203]
  %vm205 = vcmask 1045508
  %v206 = vsel %vm205, %v204, %v201
  %s207 = scalar_lea.vmem %s0, 7
  %s208 = smov 192
  %v209 = vld [vmem:[%s207] ss:$16 sm:%s208]
  %vm210 = vcmask 1047558
  %v211 = vsel %vm210, %v209, %v206
  %212 = vrot.lane.b32.xlu0 %v211, 56
  %v213 = vpop.permute.xlu0 %212
  %vm214 = vcmask 523712
  %215 = vst.msk [vmem:[%s1] sm:$0xff] %vm214, %v213
  %s216 = scalar_lea.vmem %s0, 6
  %s217 = smov 3
  %v218 = vld [vmem:[%s216] ss:$16 sm:%s217]
  %s219 = scalar_lea.vmem %s0, 6
  %s220 = smov 12
  %v221 = vld [vmem:[%s219] ss:$16 sm:%s220]
  %vm222 = vcmask 1043458
  %v223 = vsel %vm222, %v221, %v218
  %s224 = scalar_lea.vmem %s0, 6
  %s225 = smov 48
  %v226 = vld [vmem:[%s224] ss:$16 sm:%s225]
  %vm227 = vcmask 1045508
  %v228 = vsel %vm227, %v226, %v223
  %s229 = scalar_lea.vmem %s0, 6
  %s230 = smov 192
  %v231 = vld [vmem:[%s229] ss:$16 sm:%s230]
  %vm232 = vcmask 1047558
  %v233 = vsel %vm232, %v231, %v228
  %234 = vrot.lane.b32.xlu0 %v233, 48
  %v235 = vpop.permute.xlu0 %234
  %vm236 = vcmask 458112
  %237 = vst.msk [vmem:[%s1] sm:$0xff] %vm236, %v235
  %s238 = scalar_lea.vmem %s0, 5
  %s239 = smov 3
  %v240 = vld [vmem:[%s238] ss:$16 sm:%s239]
  %s241 = scalar_lea.vmem %s0, 5
  %s242 = smov 12
  %v243 = vld [vmem:[%s241] ss:$16 sm:%s242]
  %vm244 = vcmask 1043458
  %v245 = vsel %vm244, %v243, %v240
  %s246 = scalar_lea.vmem %s0, 5
  %s247 = smov 48
  %v248 = vld [vmem:[%s246] ss:$16 sm:%s247]
  %vm249 = vcmask 1045508
  %v250 = vsel %vm249, %v248, %v245
  %s251 = scalar_lea.vmem %s0, 5
  %s252 = smov 192
  %v253 = vld [vmem:[%s251] ss:$16 sm:%s252]
  %vm254 = vcmask 1047558
  %v255 = vsel %vm254, %v253, %v250
  %256 = vrot.lane.b32.xlu0 %v255, 40
  %v257 = vpop.permute.xlu0 %256
  %vm258 = vcmask 392512
  %259 = vst.msk [vmem:[%s1] sm:$0xff] %vm258, %v257
  %s260 = scalar_lea.vmem %s0, 4
  %s261 = smov 3
  %v262 = vld [vmem:[%s260] ss:$16 sm:%s261]
  %s263 = scalar_lea.vmem %s0, 4
  %s264 = smov 12
  %v265 = vld [vmem:[%s263] ss:$16 sm:%s264]
  %vm266 = vcmask 1043458
  %v267 = vsel %vm266, %v265, %v262
  %s268 = scalar_lea.vmem %s0, 4
  %s269 = smov 48
  %v270 = vld [vmem:[%s268] ss:$16 sm:%s269]
  %vm271 = vcmask 1045508
  %v272 = vsel %vm271, %v270, %v267
  %s273 = scalar_lea.vmem %s0, 4
  %s274 = smov 192
  %v275 = vld [vmem:[%s273] ss:$16 sm:%s274]
  %vm276 = vcmask 1047558
  %v277 = vsel %vm276, %v275, %v272
  %278 = vrot.lane.b32.xlu0 %v277, 32
  %v279 = vpop.permute.xlu0 %278
  %vm280 = vcmask 326912
  %281 = vst.msk [vmem:[%s1] sm:$0xff] %vm280, %v279
  %s282 = scalar_lea.vmem %s0, 3
  %s283 = smov 3
  %v284 = vld [vmem:[%s282] ss:$16 sm:%s283]
  %s285 = scalar_lea.vmem %s0, 3
  %s286 = smov 12
  %v287 = vld [vmem:[%s285] ss:$16 sm:%s286]
  %vm288 = vcmask 1043458
  %v289 = vsel %vm288, %v287, %v284
  %s290 = scalar_lea.vmem %s0, 3
  %s291 = smov 48
  %v292 = vld [vmem:[%s290] ss:$16 sm:%s291]
  %vm293 = vcmask 1045508
  %v294 = vsel %vm293, %v292, %v289
  %s295 = scalar_lea.vmem %s0, 3
  %s296 = smov 192
  %v297 = vld [vmem:[%s295] ss:$16 sm:%s296]
  %vm298 = vcmask 1047558
  %v299 = vsel %vm298, %v297, %v294
  %300 = vrot.lane.b32.xlu0 %v299, 24
  %v301 = vpop.permute.xlu0 %300
  %vm302 = vcmask 261312
  %303 = vst.msk [vmem:[%s1] sm:$0xff] %vm302, %v301
  %s304 = scalar_lea.vmem %s0, 2
  %s305 = smov 3
  %v306 = vld [vmem:[%s304] ss:$16 sm:%s305]
  %s307 = scalar_lea.vmem %s0, 2
  %s308 = smov 12
  %v309 = vld [vmem:[%s307] ss:$16 sm:%s308]
  %vm310 = vcmask 1043458
  %v311 = vsel %vm310, %v309, %v306
  %s312 = scalar_lea.vmem %s0, 2
  %s313 = smov 48
  %v314 = vld [vmem:[%s312] ss:$16 sm:%s313]
  %vm315 = vcmask 1045508
  %v316 = vsel %vm315, %v314, %v311
  %s317 = scalar_lea.vmem %s0, 2
  %s318 = smov 192
  %v319 = vld [vmem:[%s317] ss:$16 sm:%s318]
  %vm320 = vcmask 1047558
  %v321 = vsel %vm320, %v319, %v316
  %322 = vrot.lane.b32.xlu0 %v321, 16
  %v323 = vpop.permute.xlu0 %322
  %vm324 = vcmask 195712
  %325 = vst.msk [vmem:[%s1] sm:$0xff] %vm324, %v323
  %s326 = scalar_lea.vmem %s0, 1
  %s327 = smov 3
  %v328 = vld [vmem:[%s326] ss:$16 sm:%s327]
  %s329 = scalar_lea.vmem %s0, 1
  %s330 = smov 12
  %v331 = vld [vmem:[%s329] ss:$16 sm:%s330]
  %vm332 = vcmask 1043458
  %v333 = vsel %vm332, %v331, %v328
  %s334 = scalar_lea.vmem %s0, 1
  %s335 = smov 48
  %v336 = vld [vmem:[%s334] ss:$16 sm:%s335]
  %vm337 = vcmask 1045508
  %v338 = vsel %vm337, %v336, %v333
  %s339 = scalar_lea.vmem %s0, 1
  %s340 = smov 192
  %v341 = vld [vmem:[%s339] ss:$16 sm:%s340]
  %vm342 = vcmask 1047558
  %v343 = vsel %vm342, %v341, %v338
  %344 = vrot.lane.b32.xlu0 %v343, 8
  %v345 = vpop.permute.xlu0 %344
  %vm346 = vcmask 130112
  %347 = vst.msk [vmem:[%s1] sm:$0xff] %vm346, %v345

// kernel: double_conv.1
$region0: #{double_conv.1}
  #allocation0 [shape = 'u32[]', space=smem, size = 0x4, offset = 0x4, fixed_abs, tag = 'smem constant byte address 0x4 - core index']
  #allocation1 [shape = 'u32[144,128]{1,0:T(1,128)}', space=vmem, size = 0x12000, scoped, tag = 'internal scratch']
  %s0 = inlined_call_operand.vmem [shape: f32[2,16,128], index: 0, kind: input, shape index: {}]
  %s1 = inlined_call_operand.vmem [shape: f32[384,128], index: 1, kind: input, shape index: {}]
  %s2 = inlined_call_operand.vmem [shape: f32[1,8], index: 2, kind: input, shape index: {}]
  %s3 = inlined_call_operand.vmem [shape: f32[1,8], index: 3, kind: input, shape index: {}]
  %s4 = inlined_call_operand.vmem [shape: f32[384,128], index: 4, kind: input, shape index: {}]
  %s5 = inlined_call_operand.vmem [shape: f32[1,8], index: 5, kind: input, shape index: {}]
  %s6 = inlined_call_operand.vmem [shape: f32[1,8], index: 6, kind: input, shape index: {}]
  %s7 = inlined_call_operand.vmem [shape: f32[128,8], index: 7, kind: input, shape index: {}]
  %s8 = inlined_call_operand.vmem [shape: f32[8,128], index: 8, kind: input, shape index: {}]
  %s9 = inlined_call_operand.vmem [shape: f32[32,128], index: 9, kind: output, shape index: {}]
  %s10 = sld [smem:[#allocation0]]
  $region46: #{double_conv.1} parent=0
    _
  %s12 = ssub.s32 1, %s10
  %s13 = scalar_select 0, %s12, %s10
  // Predicated region
  $region2: #{double_conv.1} parent=0 // pred_check
    _
  $region3: #{double_conv.1} parent=0 // pred_check_branch
    %15 = sbr.rel (0) target = $region5
  $region4: #{double_conv.1} parent=0 // pred_region
    _
  $region5: #{double_conv.1} parent=0 // pred_fallthru
    _
  // Predicated region
  $region6: #{double_conv.1} parent=0 // pred_check
    _
  $region7: #{double_conv.1} parent=0 // pred_check_branch
    %17 = sbr.rel (0) target = $region9
  $region8: #{double_conv.1} parent=0 // pred_region
    _
  $region9: #{double_conv.1} parent=0 // pred_fallthru
    _
  // Predicated region
  $region10: #{double_conv.1} parent=0 // pred_check
    _
  $region11: #{double_conv.1} parent=0 // pred_check_branch
    %19 = sbr.rel (0) target = $region13
  $region12: #{double_conv.1} parent=0 // pred_region
    _
  $region13: #{double_conv.1} parent=0 // pred_fallthru
    _
  // Predicated region
  $region14: #{double_conv.1} parent=0 // pred_check
    _
  $region15: #{double_conv.1} parent=0 // pred_check_branch
    %21 = sbr.rel (0) target = $region17
  $region16: #{double_conv.1} parent=0 // pred_region
    _
  $region17: #{double_conv.1} parent=0 // pred_fallthru
    _
  // Predicated region
  $region18: #{double_conv.1} parent=0 // pred_check
    _
  $region19: #{double_conv.1} parent=0 // pred_check_branch
    %23 = sbr.rel (0) target = $region21
  $region20: #{double_conv.1} parent=0 // pred_region
    _
  $region21: #{double_conv.1} parent=0 // pred_fallthru
    _
  // Predicated region
  $region22: #{double_conv.1} parent=0 // pred_check
    _
  $region23: #{double_conv.1} parent=0 // pred_check_branch
    %25 = sbr.rel (0) target = $region25
  $region24: #{double_conv.1} parent=0 // pred_region
    _
  $region25: #{double_conv.1} parent=0 // pred_fallthru
    _
  // Predicated region
  $region26: #{double_conv.1} parent=0 // pred_check
    _
  $region27: #{double_conv.1} parent=0 // pred_check_branch
    %27 = sbr.rel (0) target = $region29
  $region28: #{double_conv.1} parent=0 // pred_region
    _
  $region29: #{double_conv.1} parent=0 // pred_fallthru
    _
  // Predicated region
  $region30: #{double_conv.1} parent=0 // pred_check
    _
  $region31: #{double_conv.1} parent=0 // pred_check_branch
    %29 = sbr.rel (0) target = $region33
  $region32: #{double_conv.1} parent=0 // pred_region
    _
  $region33: #{double_conv.1} parent=0 // pred_fallthru
    _
  // Predicated region
  $region34: #{double_conv.1} parent=0 // pred_check
    _
  $region35: #{double_conv.1} parent=0 // pred_check_branch
    %31 = sbr.rel (0) target = $region37
  $region36: #{double_conv.1} parent=0 // pred_region
    _
  $region37: #{double_conv.1} parent=0 // pred_fallthru
    _
  %v32 = vld [vmem:[%s7] sm:$0xff]
  %v33 = vld [vmem:[%s7 + $0x8] sm:$0xff]
  %v34 = vld [vmem:[%s7 + $0x10] sm:$0xff]
  %v35 = vld [vmem:[%s7 + $0x18] sm:$0xff]
  %v36 = vld [vmem:[%s7 + $0x20] sm:$0xff]
  %v37 = vld [vmem:[%s7 + $0x28] sm:$0xff]
  %v38 = vld [vmem:[%s7 + $0x30] sm:$0xff]
  %v39 = vld [vmem:[%s7 + $0x38] sm:$0xff]
  %v40 = vld [vmem:[%s7 + $0x40] sm:$0xff]
  %v41 = vld [vmem:[%s7 + $0x48] sm:$0xff]
  %v42 = vld [vmem:[%s7 + $0x50] sm:$0xff]
  %v43 = vld [vmem:[%s7 + $0x58] sm:$0xff]
  %v44 = vld [vmem:[%s7 + $0x60] sm:$0xff]
  %v45 = vld [vmem:[%s7 + $0x68] sm:$0xff]
  %v46 = vld [vmem:[%s7 + $0x70] sm:$0xff]
  %v47 = vld [vmem:[%s7 + $0x78] sm:$0xff]
  %v48 = vld [vmem:[%s8] sm:$0xff]
  %v49 = vld [vmem:[%s0] sm:$0xff]
  %v50 = vld [vmem:[%s0 + $0x8] sm:$0xff]
  %v51 = vld [vmem:[%s0 + $0x10] sm:$0xff]
  %v52 = vld [vmem:[%s0 + $0x18] sm:$0xff]
  %vm57 = vcmask 1040384
  %v58 = vrot.slane %v49, 7
  %v59 = vrot.slane %v50, 7
  %v60 = vsel %vm57, %v58, %v59
  %v61 = vrot.slane %v51, 7
  %v62 = vrot.slane %v52, 7
  %v63 = vsel %vm57, %v61, %v62
  %v70 = vsel %vm57, 0.0, %v58
  %v71 = vsel %vm57, 0.0, %v61
  %v72 = vsel %vm57, %v59, 0.0
  %v73 = vsel %vm57, %v62, 0.0
  %vm78 = vcmask 1046528
  %v79 = vrot.slane %v70, 1
  %v80 = vrot.slane %v60, 1
  %v81 = vsel %vm78, %v79, %v80
  %v82 = vrot.slane %v72, 1
  %v83 = vsel %vm78, %v80, %v82
  %v84 = vrot.slane %v71, 1
  %v85 = vrot.slane %v63, 1
  %v86 = vsel %vm78, %v84, %v85
  %v87 = vrot.slane %v73, 1
  %v88 = vsel %vm78, %v85, %v87
  %vm93 = vcmask 1045504
  %v94 = vrot.slane %v70, 2
  %v95 = vrot.slane %v60, 2
  %v96 = vsel %vm93, %v94, %v95
  %v97 = vrot.slane %v72, 2
  %v98 = vsel %vm93, %v95, %v97
  %v99 = vrot.slane %v71, 2
  %v100 = vrot.slane %v63, 2
  %v101 = vsel %vm93, %v99, %v100
  %v102 = vrot.slane %v73, 2
  %v103 = vsel %vm93, %v100, %v102
  %v108 = vld [vmem:[%s1] sm:$0xff]
  %v109 = vld [vmem:[%s1 + $0x8] sm:$0xff]
  %v110 = vld [vmem:[%s1 + $0x10] sm:$0xff]
  %v111 = vld [vmem:[%s1 + $0x18] sm:$0xff]
  %v112 = vld [vmem:[%s1 + $0x20] sm:$0xff]
  %v113 = vld [vmem:[%s1 + $0x28] sm:$0xff]
  %v114 = vld [vmem:[%s1 + $0x30] sm:$0xff]
  %v115 = vld [vmem:[%s1 + $0x38] sm:$0xff]
  %v116 = vld [vmem:[%s1 + $0x40] sm:$0xff]
  %v117 = vld [vmem:[%s1 + $0x48] sm:$0xff]
  %v118 = vld [vmem:[%s1 + $0x50] sm:$0xff]
  %v119 = vld [vmem:[%s1 + $0x58] sm:$0xff]
  %v120 = vld [vmem:[%s1 + $0x60] sm:$0xff]
  %v121 = vld [vmem:[%s1 + $0x68] sm:$0xff]
  %v122 = vld [vmem:[%s1 + $0x70] sm:$0xff]
  %v123 = vld [vmem:[%s1 + $0x78] sm:$0xff]
  %v124 = vld [vmem:[%s1 + $0x80] sm:$0xff]
  %v125 = vld [vmem:[%s1 + $0x88] sm:$0xff]
  %v126 = vld [vmem:[%s1 + $0x90] sm:$0xff]
  %v127 = vld [vmem:[%s1 + $0x98] sm:$0xff]
  %v128 = vld [vmem:[%s1 + $0xa0] sm:$0xff]
  %v129 = vld [vmem:[%s1 + $0xa8] sm:$0xff]
  %v130 = vld [vmem:[%s1 + $0xb0] sm:$0xff]
  %v131 = vld [vmem:[%s1 + $0xb8] sm:$0xff]
  %v132 = vld [vmem:[%s1 + $0xc0] sm:$0xff]
  %v133 = vld [vmem:[%s1 + $0xc8] sm:$0xff]
  %v134 = vld [vmem:[%s1 + $0xd0] sm:$0xff]
  %v135 = vld [vmem:[%s1 + $0xd8] sm:$0xff]
  %v136 = vld [vmem:[%s1 + $0xe0] sm:$0xff]
  %v137 = vld [vmem:[%s1 + $0xe8] sm:$0xff]
  %v138 = vld [vmem:[%s1 + $0xf0] sm:$0xff]
  %v139 = vld [vmem:[%s1 + $0xf8] sm:$0xff]
  %v140 = vld [vmem:[%s1 + $0x100] sm:$0xff]
  %v141 = vld [vmem:[%s1 + $0x108] sm:$0xff]
  %v142 = vld [vmem:[%s1 + $0x110] sm:$0xff]
  %v143 = vld [vmem:[%s1 + $0x118] sm:$0xff]
  %v144 = vld [vmem:[%s1 + $0x120] sm:$0xff]
  %v145 = vld [vmem:[%s1 + $0x128] sm:$0xff]
  %v146 = vld [vmem:[%s1 + $0x130] sm:$0xff]
  %v147 = vld [vmem:[%s1 + $0x138] sm:$0xff]
  %v148 = vld [vmem:[%s1 + $0x140] sm:$0xff]
  %v149 = vld [vmem:[%s1 + $0x148] sm:$0xff]
  %v150 = vld [vmem:[%s1 + $0x150] sm:$0xff]
  %v151 = vld [vmem:[%s1 + $0x158] sm:$0xff]
  %v152 = vld [vmem:[%s1 + $0x160] sm:$0xff]
  %v153 = vld [vmem:[%s1 + $0x168] sm:$0xff]
  %v154 = vld [vmem:[%s1 + $0x170] sm:$0xff]
  %v155 = vld [vmem:[%s1 + $0x178] sm:$0xff]
  %156 = vmatprep.subr.mxu0 0.0
  %157 = vmatpush1.msra.mxu0 %v123
  %158 = vmatprep.subr.mxu0 0.0
  %159 = vmatpush1.msra.mxu0 %v122
  %160 = vmatprep.subr.mxu0 0.0
  %161 = vmatpush1.msra.mxu0 %v121
  %162 = vmatprep.subr.mxu0 0.0
  %163 = vmatpush1.msra.mxu0 %v120
  %164 = vmatprep.subr.mxu0 0.0
  %165 = vmatpush1.msra.mxu0 %v119
  %166 = vmatprep.subr.mxu0 0.0
  %167 = vmatpush1.msra.mxu0 %v118
  %168 = vmatprep.subr.mxu0 0.0
  %169 = vmatpush1.msra.mxu0 %v117
  %170 = vmatprep.subr.mxu0 0.0
  %171 = vmatpush1.msra.mxu0 %v116
  %172 = vmatprep.subr.mxu0 0.0
  %173 = vmatpush1.msra.mxu0 %v115
  %174 = vmatprep.subr.mxu0 0.0
  %175 = vmatpush1.msra.mxu0 %v114
  %176 = vmatprep.subr.mxu0 0.0
  %177 = vmatpush1.msra.mxu0 %v113
  %178 = vmatprep.subr.mxu0 0.0
  %179 = vmatpush1.msra.mxu0 %v112
  %180 = vmatprep.subr.mxu0 0.0
  %181 = vmatpush1.msra.mxu0 %v111
  %182 = vmatprep.subr.mxu0 0.0
  %183 = vmatpush1.msra.mxu0 %v110
  %184 = vmatprep.subr.mxu0 0.0
  %185 = vmatpush1.msra.mxu0 %v109
  %186 = vmatprep.subr.mxu0 0.0
  %187 = vmatpush1.msra.mxu0 %v108
  %188 = vmatprep.subr.mxu0 0.0
  %189 = vmatpush2.msra.mxu0 %v139
  %190 = vmatprep.subr.mxu0 0.0
  %191 = vmatpush2.msra.mxu0 %v138
  %192 = vmatprep.subr.mxu0 0.0
  %193 = vmatpush2.msra.mxu0 %v137
  %194 = vmatprep.subr.mxu0 0.0
  %195 = vmatpush2.msra.mxu0 %v136
  %196 = vmatprep.subr.mxu0 0.0
  %197 = vmatpush2.msra.mxu0 %v135
  %198 = vmatprep.subr.mxu0 0.0
  %199 = vmatpush2.msra.mxu0 %v134
  %200 = vmatprep.subr.mxu0 0.0
  %201 = vmatpush2.msra.mxu0 %v133
  %202 = vmatprep.subr.mxu0 0.0
  %203 = vmatpush2.msra.mxu0 %v132
  %204 = vmatprep.subr.mxu0 0.0
  %205 = vmatpush2.msra.mxu0 %v131
  %206 = vmatprep.subr.mxu0 0.0
  %207 = vmatpush2.msra.mxu0 %v130
  %208 = vmatprep.subr.mxu0 0.0
  %209 = vmatpush2.msra.mxu0 %v129
  %210 = vmatprep.subr.mxu0 0.0
  %211 = vmatpush2.msra.mxu0 %v128
  %212 = vmatprep.subr.mxu0 0.0
  %213 = vmatpush2.msra.mxu0 %v127
  %214 = vmatprep.subr.mxu0 0.0
  %215 = vmatpush2.msra.mxu0 %v126
  %216 = vmatprep.subr.mxu0 0.0
  %217 = vmatpush2.msra.mxu0 %v125
  %218 = vmatprep.subr.mxu0 0.0
  %219 = vmatpush2.msra.mxu0 %v124
  %220 = vmatprep.mubr.f32.mxu0 %v81
  %221 = vmatmul.mubr.f32.gmra.mxu0 %v70
  %v222 = vpop.f32.mrf.mxu0
  %v223 = vadd.f32 0.0, %v222
  %v224 = vpop.f32.mrf.mxu0
  %225 = vmatprep.mubr.f32.mxu0 %v83
  %226 = vmatmul.mubr.f32.gmra.mxu0 %v60
  %v227 = vpop.f32.mrf.mxu0
  %v228 = vadd.f32 0.0, %v227
  %v229 = vpop.f32.mrf.mxu0
  %230 = vmatprep.mubr.f32.mxu0 %v86
  %231 = vmatmul.mubr.f32.gmra.mxu0 %v71
  %v232 = vpop.f32.mrf.mxu0
  %v233 = vadd.f32 0.0, %v232
  %v234 = vpop.f32.mrf.mxu0
  %235 = vmatprep.mubr.f32.mxu0 %v88
  %236 = vmatmul.mubr.f32.gmra.mxu0 %v63
  %v237 = vpop.f32.mrf.mxu0
  %v238 = vadd.f32 0.0, %v237
  %v239 = vpop.f32.mrf.mxu0
  %240 = vdwg.mxu0
  %241 = vmatprep.subr.mxu0 0.0
  %242 = vmatpush1.msra.mxu0 %v155
  %243 = vmatprep.subr.mxu0 0.0
  %244 = vmatpush1.msra.mxu0 %v154
  %245 = vmatprep.subr.mxu0 0.0
  %246 = vmatpush1.msra.mxu0 %v153
  %247 = vmatprep.subr.mxu0 0.0
  %248 = vmatpush1.msra.mxu0 %v152
  %249 = vmatprep.subr.mxu0 0.0
  %250 = vmatpush1.msra.mxu0 %v151
  %251 = vmatprep.subr.mxu0 0.0
  %252 = vmatpush1.msra.mxu0 %v150
  %253 = vmatprep.subr.mxu0 0.0
  %254 = vmatpush1.msra.mxu0 %v149
  %255 = vmatprep.subr.mxu0 0.0
  %256 = vmatpush1.msra.mxu0 %v148
  %257 = vmatprep.subr.mxu0 0.0
  %258 = vmatpush1.msra.mxu0 %v147
  %259 = vmatprep.subr.mxu0 0.0
  %260 = vmatpush1.msra.mxu0 %v146
  %261 = vmatprep.subr.mxu0 0.0
  %262 = vmatpush1.msra.mxu0 %v145
  %263 = vmatprep.subr.mxu0 0.0
  %264 = vmatpush1.msra.mxu0 %v144
  %265 = vmatprep.subr.mxu0 0.0
  %266 = vmatpush1.msra.mxu0 %v143
  %267 = vmatprep.subr.mxu0 0.0
  %268 = vmatpush1.msra.mxu0 %v142
  %269 = vmatprep.subr.mxu0 0.0
  %270 = vmatpush1.msra.mxu0 %v141
  %271 = vmatprep.subr.mxu0 0.0
  %272 = vmatpush1.msra.mxu0 %v140
  %273 = vmatprep.subr.mxu0 0.0
  %274 = vmatpush2.msra.mxu0 0.0
  %275 = vmatprep.subr.mxu0 0.0
  %276 = vmatpush2.msra.mxu0 0.0
  %277 = vmatprep.subr.mxu0 0.0
  %278 = vmatpush2.msra.mxu0 0.0
  %279 = vmatprep.subr.mxu0 0.0
  %280 = vmatpush2.msra.mxu0 0.0
  %281 = vmatprep.subr.mxu0 0.0
  %282 = vmatpush2.msra.mxu0 0.0
  %283 = vmatprep.subr.mxu0 0.0
  %284 = vmatpush2.msra.mxu0 0.0
  %285 = vmatprep.subr.mxu0 0.0
  %286 = vmatpush2.msra.mxu0 0.0
  %287 = vmatprep.subr.mxu0 0.0
  %288 = vmatpush2.msra.mxu0 0.0
  %289 = vmatprep.subr.mxu0 0.0
  %290 = vmatpush2.msra.mxu0 0.0
  %291 = vmatprep.subr.mxu0 0.0
  %292 = vmatpush2.msra.mxu0 0.0
  %293 = vmatprep.subr.mxu0 0.0
  %294 = vmatpush2.msra.mxu0 0.0
  %295 = vmatprep.subr.mxu0 0.0
  %296 = vmatpush2.msra.mxu0 0.0
  %297 = vmatprep.subr.mxu0 0.0
  %298 = vmatpush2.msra.mxu0 0.0
  %299 = vmatprep.subr.mxu0 0.0
  %300 = vmatpush2.msra.mxu0 0.0
  %301 = vmatprep.subr.mxu0 0.0
  %302 = vmatpush2.msra.mxu0 0.0
  %303 = vmatprep.subr.mxu0 0.0
  %304 = vmatpush2.msra.mxu0 0.0
  %305 = vmatprep.mubr.f32.mxu0 0.0
  %306 = vmatmul.mubr.f32.gmra.mxu0 %v96
  %v307 = vpop.f32.mrf.mxu0
  %v308 = vadd.f32 %v223, %v307
  %v309 = vpop.f32.mrf.mxu0
  %310 = vmatprep.mubr.f32.mxu0 0.0
  %311 = vmatmul.mubr.f32.gmra.mxu0 %v98
  %v312 = vpop.f32.mrf.mxu0
  %v313 = vadd.f32 %v228, %v312
  %v314 = vpop.f32.mrf.mxu0
  %315 = vmatprep.mubr.f32.mxu0 0.0
  %316 = vmatmul.mubr.f32.gmra.mxu0 %v101
  %v317 = vpop.f32.mrf.mxu0
  %v318 = vadd.f32 %v233, %v317
  %v319 = vpop.f32.mrf.mxu0
  %320 = vmatprep.mubr.f32.mxu0 0.0
  %321 = vmatmul.mubr.f32.gmra.mxu0 %v103
  %v322 = vpop.f32.mrf.mxu0
  %v323 = vadd.f32 %v238, %v322
  %v324 = vpop.f32.mrf.mxu0
  %325 = vdwg.mxu0
  %v326 = vadd.f32 %v308, %v313
  %v327 = vadd.f32 %v326, %v318
  %v328 = vadd.f32 %v327, %v323
  %v329 = vrot.slane %v328, 4
  %v330 = vadd.f32 %v328, %v329
  %v331 = vrot.slane %v330, 2
  %v332 = vadd.f32 %v330, %v331
  %v333 = vrot.slane %v332, 1
  %v334 = vadd.f32 %v332, %v333
  %v335 = vmul.f32 %v308, %v308
  %v336 = vmul.f32 %v313, %v313
  %v337 = vmul.f32 %v318, %v318
  %v338 = vmul.f32 %v323, %v323
  %v339 = vadd.f32 %v335, %v336
  %v340 = vadd.f32 %v339, %v337
  %v341 = vadd.f32 %v340, %v338
  %v342 = vrot.slane %v341, 4
  %v343 = vadd.f32 %v341, %v342
  %v344 = vrot.slane %v343, 2
  %v345 = vadd.f32 %v343, %v344
  %v346 = vrot.slane %v345, 1
  %v347 = vadd.f32 %v345, %v346
  %v348 = vsel %vm57, %v334, %v347
  %349 = vmatprep.subr.mxu0 0.0
  %350 = vmatpush1.msra.mxu0 %v47
  %351 = vmatprep.subr.mxu0 0.0
  %352 = vmatpush1.msra.mxu0 %v46
  %353 = vmatprep.subr.mxu0 0.0
  %354 = vmatpush1.msra.mxu0 %v45
  %355 = vmatprep.subr.mxu0 0.0
  %356 = vmatpush1.msra.mxu0 %v44
  %357 = vmatprep.subr.mxu0 0.0
  %358 = vmatpush1.msra.mxu0 %v43
  %359 = vmatprep.subr.mxu0 0.0
  %360 = vmatpush1.msra.mxu0 %v42
  %361 = vmatprep.subr.mxu0 0.0
  %362 = vmatpush1.msra.mxu0 %v41
  %363 = vmatprep.subr.mxu0 0.0
  %364 = vmatpush1.msra.mxu0 %v40
  %365 = vmatprep.subr.mxu0 0.0
  %366 = vmatpush1.msra.mxu0 %v39
  %367 = vmatprep.subr.mxu0 0.0
  %368 = vmatpush1.msra.mxu0 %v38
  %369 = vmatprep.subr.mxu0 0.0
  %370 = vmatpush1.msra.mxu0 %v37
  %371 = vmatprep.subr.mxu0 0.0
  %372 = vmatpush1.msra.mxu0 %v36
  %373 = vmatprep.subr.mxu0 0.0
  %374 = vmatpush1.msra.mxu0 %v35
  %375 = vmatprep.subr.mxu0 0.0
  %376 = vmatpush1.msra.mxu0 %v34
  %377 = vmatprep.subr.mxu0 0.0
  %378 = vmatpush1.msra.mxu0 %v33
  %379 = vmatprep.subr.mxu0 0.0
  %380 = vmatpush1.msra.mxu0 %v32
  %381 = vmatprep.subr.mxu0 0.0
  %382 = vmatpush2.msra.mxu0 0.0
  %383 = vmatprep.subr.mxu0 0.0
  %384 = vmatpush2.msra.mxu0 0.0
  %385 = vmatprep.subr.mxu0 0.0
  %386 = vmatpush2.msra.mxu0 0.0
  %387 = vmatprep.subr.mxu0 0.0
  %388 = vmatpush2.msra.mxu0 0.0
  %389 = vmatprep.subr.mxu0 0.0
  %390 = vmatpush2.msra.mxu0 0.0
  %391 = vmatprep.subr.mxu0 0.0
  %392 = vmatpush2.msra.mxu0 0.0
  %393 = vmatprep.subr.mxu0 0.0
  %394 = vmatpush2.msra.mxu0 0.0
  %395 = vmatprep.subr.mxu0 0.0
  %396 = vmatpush2.msra.mxu0 0.0
  %397 = vmatprep.subr.mxu0 0.0
  %398 = vmatpush2.msra.mxu0 0.0
  %399 = vmatprep.subr.mxu0 0.0
  %400 = vmatpush2.msra.mxu0 0.0
  %401 = vmatprep.subr.mxu0 0.0
  %402 = vmatpush2.msra.mxu0 0.0
  %403 = vmatprep.subr.mxu0 0.0
  %404 = vmatpush2.msra.mxu0 0.0
  %405 = vmatprep.subr.mxu0 0.0
  %406 = vmatpush2.msra.mxu0 0.0
  %407 = vmatprep.subr.mxu0 0.0
  %408 = vmatpush2.msra.mxu0 0.0
  %409 = vmatprep.subr.mxu0 0.0
  %410 = vmatpush2.msra.mxu0 0.0
  %411 = vmatprep.subr.mxu0 0.0
  %412 = vmatpush2.msra.mxu0 0.0
  %413 = vmatprep.mubr.f32.mxu0 0.0
  %414 = vmatmul.mubr.f32.gmra.mxu0 %v348
  %v415 = vpop.f32.mrf.mxu0
  %v416 = vadd.f32 0.0, %v415
  %v417 = vpop.f32.mrf.mxu0
  %418 = vdwg.mxu0
  %v419 = vmul.f32 %v416, 0.001953125
  %v420 = vmul.f32 %v419, %v419
  %v422 = vrot.slane %v420, 7
  %v424 = vsub.f32 %v419, %v422
  %v425 = vld [vmem:[%s2] sm:$0x1]
  %v426 = vadd.f32 %v424, 1e-05
  %v427 = vrsqrt.pop %v426
  %v430 = vunpack.c.l.s4 1966171168
  %v431 = vunpack.c.0.s8 %v430
  %v432 = vlaneseq
  %v433 = vshrl.u32 %v432, 7
  %v434 = vsub.s32 %v431, %v433
  %v435 = vrot.slane %v427, %v434
  %v436 = vcombine.high %v435, %v435
  %v438 = vunpack.c.l.s4 1966171168
  %v439 = vunpack.c.0.s8 %v438
  %v440 = vlaneseq
  %v441 = vshrl.u32 %v440, 7
  %v442 = vsub.s32 %v439, %v441
  %v443 = vrot.slane %v436, %v442
  %v445 = vmul.f32 %v425, %v443
  %v446 = vld [vmem:[%s3] sm:$0x1]
  %v447 = vmul.f32 %v419, %v445
  %v448 = vsub.f32 %v446, %v447
  %v450 = vlaneseq
  %v451 = vshrl.u32 %v450, 7
  %v452 = vsub.s32 0, %v451
  %v453 = vrot.slane %v448, %v452
  %v455 = vsel %vm57, %v445, %v453
  %vm456 = vcmask 64512
  %v458 = vsel %vm456, %v455, 0
  %460 = vmatprep.subr.mxu0 0.0
  %461 = vmatpush1.msra.mxu0 0.0
  %462 = vmatprep.subr.mxu0 0.0
  %463 = vmatpush1.msra.mxu0 0.0
  %464 = vmatprep.subr.mxu0 0.0
  %465 = vmatpush1.msra.mxu0 0.0
  %466 = vmatprep.subr.mxu0 0.0
  %467 = vmatpush1.msra.mxu0 0.0
  %468 = vmatprep.subr.mxu0 0.0
  %469 = vmatpush1.msra.mxu0 0.0
  %470 = vmatprep.subr.mxu0 0.0
  %471 = vmatpush1.msra.mxu0 0.0
  %472 = vmatprep.subr.mxu0 0.0
  %473 = vmatpush1.msra.mxu0 0.0
  %474 = vmatprep.subr.mxu0 0.0
  %475 = vmatpush1.msra.mxu0 0.0
  %476 = vmatprep.subr.mxu0 0.0
  %477 = vmatpush1.msra.mxu0 0.0
  %478 = vmatprep.subr.mxu0 0.0
  %479 = vmatpush1.msra.mxu0 0.0
  %480 = vmatprep.subr.mxu0 0.0
  %481 = vmatpush1.msra.mxu0 0.0
  %482 = vmatprep.subr.mxu0 0.0
  %483 = vmatpush1.msra.mxu0 0.0
  %484 = vmatprep.subr.mxu0 0.0
  %485 = vmatpush1.msra.mxu0 0.0
  %486 = vmatprep.subr.mxu0 0.0
  %487 = vmatpush1.msra.mxu0 0.0
  %488 = vmatprep.subr.mxu0 0.0
  %489 = vmatpush1.msra.mxu0 0.0
  %490 = vmatprep.subr.mxu0 0.0
  %491 = vmatpush1.msra.mxu0 %v48
  %492 = vmatprep.subr.mxu0 0.0
  %493 = vmatpush2.msra.mxu0 0.0
  %494 = vmatprep.subr.mxu0 0.0
  %495 = vmatpush2.msra.mxu0 0.0
  %496 = vmatprep.subr.mxu0 0.0
  %497 = vmatpush2.msra.mxu0 0.0
  %498 = vmatprep.subr.mxu0 0.0
  %499 = vmatpush2.msra.mxu0 0.0
  %500 = vmatprep.subr.mxu0 0.0
  %501 = vmatpush2.msra.mxu0 0.0
  %502 = vmatprep.subr.mxu0 0.0
  %503 = vmatpush2.msra.mxu0 0.0
  %504 = vmatprep.subr.mxu0 0.0
  %505 = vmatpush2.msra.mxu0 0.0
  %506 = vmatprep.subr.mxu0 0.0
  %507 = vmatpush2.msra.mxu0 0.0
  %508 = vmatprep.subr.mxu0 0.0
  %509 = vmatpush2.msra.mxu0 0.0
  %510 = vmatprep.subr.mxu0 0.0
  %511 = vmatpush2.msra.mxu0 0.0
  %512 = vmatprep.subr.mxu0 0.0
  %513 = vmatpush2.msra.mxu0 0.0
  %514 = vmatprep.subr.mxu0 0.0
  %515 = vmatpush2.msra.mxu0 0.0
  %516 = vmatprep.subr.mxu0 0.0
  %517 = vmatpush2.msra.mxu0 0.0
  %518 = vmatprep.subr.mxu0 0.0
  %519 = vmatpush2.msra.mxu0 0.0
  %520 = vmatprep.subr.mxu0 0.0
  %521 = vmatpush2.msra.mxu0 0.0
  %522 = vmatprep.subr.mxu0 0.0
  %523 = vmatpush2.msra.mxu0 0.0
  %524 = vmatprep.mubr.f32.mxu0 0.0
  %525 = vmatmul.mubr.f32.gmra.mxu0 %v458
  %v526 = vpop.f32.mrf.mxu0
  %v527 = vadd.f32 0.0, %v526
  %v528 = vpop.f32.mrf.mxu0
  %529 = vdwg.mxu0
  %v530 = vlaneseq
  %v531 = vshrl.u32 %v530, 7
  %v532 = vsub.s32 0, %v531
  %v533 = vrot.slane %v527, %v532
  %v534 = vmul.f32 %v308, %v533
  %v535 = vmul.f32 %v313, %v533
  %v536 = vmul.f32 %v318, %v533
  %v537 = vmul.f32 %v323, %v533
  %v538 = vlaneseq
  %v539 = vshrl.u32 %v538, 7
  %v540 = vsub.s32 1, %v539
  %v541 = vrot.slane %v527, %v540
  %v542 = vadd.f32 %v534, %v541
  %v543 = vadd.f32 %v535, %v541
  %v544 = vadd.f32 %v536, %v541
  %v545 = vadd.f32 %v537, %v541
  %v546 = vmax.f32 %v542, 0.0
  %v547 = vmax.f32 %v543, 0.0
  %v548 = vmax.f32 %v544, 0.0
  %v549 = vmax.f32 %v545, 0.0
  %v554 = vrot.slane %v546, 7
  %v555 = vrot.slane %v547, 7
  %v556 = vsel %vm57, %v554, %v555
  %v557 = vrot.slane %v548, 7
  %v558 = vrot.slane %v549, 7
  %v559 = vsel %vm57, %v557, %v558
  %v566 = vsel %vm57, 0.0, %v554
  %v567 = vsel %vm57, 0.0, %v557
  %v568 = vsel %vm57, %v555, 0.0
  %v569 = vsel %vm57, %v558, 0.0
  %v574 = vrot.slane %v566, 1
  %v575 = vrot.slane %v556, 1
  %v576 = vsel %vm78, %v574, %v575
  %v577 = vrot.slane %v568, 1
  %v578 = vsel %vm78, %v575, %v577
  %v579 = vrot.slane %v567, 1
  %v580 = vrot.slane %v559, 1
  %v581 = vsel %vm78, %v579, %v580
  %v582 = vrot.slane %v569, 1
  %v583 = vsel %vm78, %v580, %v582
  %v588 = vrot.slane %v566, 2
  %v589 = vrot.slane %v556, 2
  %v590 = vsel %vm93, %v588, %v589
  %v591 = vrot.slane %v568, 2
  %v592 = vsel %vm93, %v589, %v591
  %v593 = vrot.slane %v567, 2
  %v594 = vrot.slane %v559, 2
  %v595 = vsel %vm93, %v593, %v594
  %v596 = vrot.slane %v569, 2
  %v597 = vsel %vm93, %v594, %v596
  %v602 = vld [vmem:[%s4] sm:$0xff]
  %v603 = vld [vmem:[%s4 + $0x8] sm:$0xff]
  %v604 = vld [vmem:[%s4 + $0x10] sm:$0xff]
  %v605 = vld [vmem:[%s4 + $0x18] sm:$0xff]
  %v606 = vld [vmem:[%s4 + $0x20] sm:$0xff]
  %v607 = vld [vmem:[%s4 + $0x28] sm:$0xff]
  %v608 = vld [vmem:[%s4 + $0x30] sm:$0xff]
  %v609 = vld [vmem:[%s4 + $0x38] sm:$0xff]
  %v610 = vld [vmem:[%s4 + $0x40] sm:$0xff]
  %v611 = vld [vmem:[%s4 + $0x48] sm:$0xff]
  %v612 = vld [vmem:[%s4 + $0x50] sm:$0xff]
  %v613 = vld [vmem:[%s4 + $0x58] sm:$0xff]
  %v614 = vld [vmem:[%s4 + $0x60] sm:$0xff]
  %v615 = vld [vmem:[%s4 + $0x68] sm:$0xff]
  %v616 = vld [vmem:[%s4 + $0x70] sm:$0xff]
  %v617 = vld [vmem:[%s4 + $0x78] sm:$0xff]
  %v618 = vld [vmem:[%s4 + $0x80] sm:$0xff]
  %v619 = vld [vmem:[%s4 + $0x88] sm:$0xff]
  %v620 = vld [vmem:[%s4 + $0x90] sm:$0xff]
  %v621 = vld [vmem:[%s4 + $0x98] sm:$0xff]
  %v622 = vld [vmem:[%s4 + $0xa0] sm:$0xff]
  %v623 = vld [vmem:[%s4 + $0xa8] sm:$0xff]
  %v624 = vld [vmem:[%s4 + $0xb0] sm:$0xff]
  %v625 = vld [vmem:[%s4 + $0xb8] sm:$0xff]
  %v626 = vld [vmem:[%s4 + $0xc0] sm:$0xff]
  %v627 = vld [vmem:[%s4 + $0xc8] sm:$0xff]
  %v628 = vld [vmem:[%s4 + $0xd0] sm:$0xff]
  %v629 = vld [vmem:[%s4 + $0xd8] sm:$0xff]
  %v630 = vld [vmem:[%s4 + $0xe0] sm:$0xff]
  %v631 = vld [vmem:[%s4 + $0xe8] sm:$0xff]
  %v632 = vld [vmem:[%s4 + $0xf0] sm:$0xff]
  %v633 = vld [vmem:[%s4 + $0xf8] sm:$0xff]
  %v634 = vld [vmem:[%s4 + $0x100] sm:$0xff]
  %v635 = vld [vmem:[%s4 + $0x108] sm:$0xff]
  %v636 = vld [vmem:[%s4 + $0x110] sm:$0xff]
  %v637 = vld [vmem:[%s4 + $0x118] sm:$0xff]
  %v638 = vld [vmem:[%s4 + $0x120] sm:$0xff]
  %v639 = vld [vmem:[%s4 + $0x128] sm:$0xff]
  %v640 = vld [vmem:[%s4 + $0x130] sm:$0xff]
  %v641 = vld [vmem:[%s4 + $0x138] sm:$0xff]
  %v642 = vld [vmem:[%s4 + $0x140] sm:$0xff]
  %v643 = vld [vmem:[%s4 + $0x148] sm:$0xff]
  %v644 = vld [vmem:[%s4 + $0x150] sm:$0xff]
  %v645 = vld [vmem:[%s4 + $0x158] sm:$0xff]
  %v646 = vld [vmem:[%s4 + $0x160] sm:$0xff]
  %v647 = vld [vmem:[%s4 + $0x168] sm:$0xff]
  %v648 = vld [vmem:[%s4 + $0x170] sm:$0xff]
  %v649 = vld [vmem:[%s4 + $0x178] sm:$0xff]
  %650 = vmatprep.subr.mxu0 0.0
  %651 = vmatpush1.msra.mxu0 %v617
  %652 = vmatprep.subr.mxu0 0.0
  %653 = vmatpush1.msra.mxu0 %v616
  %654 = vmatprep.subr.mxu0 0.0
  %655 = vmatpush1.msra.mxu0 %v615
  %656 = vmatprep.subr.mxu0 0.0
  %657 = vmatpush1.msra.mxu0 %v614
  %658 = vmatprep.subr.mxu0 0.0
  %659 = vmatpush1.msra.mxu0 %v613
  %660 = vmatprep.subr.mxu0 0.0
  %661 = vmatpush1.msra.mxu0 %v612
  %662 = vmatprep.subr.mxu0 0.0
  %663 = vmatpush1.msra.mxu0 %v611
  %664 = vmatprep.subr.mxu0 0.0
  %665 = vmatpush1.msra.mxu0 %v610
  %666 = vmatprep.subr.mxu0 0.0
  %667 = vmatpush1.msra.mxu0 %v609
  %668 = vmatprep.subr.mxu0 0.0
  %669 = vmatpush1.msra.mxu0 %v608
  %670 = vmatprep.subr.mxu0 0.0
  %671 = vmatpush1.msra.mxu0 %v607
  %672 = vmatprep.subr.mxu0 0.0
  %673 = vmatpush1.msra.mxu0 %v606
  %674 = vmatprep.subr.mxu0 0.0
  %675 = vmatpush1.msra.mxu0 %v605
  %676 = vmatprep.subr.mxu0 0.0
  %677 = vmatpush1.msra.mxu0 %v604
  %678 = vmatprep.subr.mxu0 0.0
  %679 = vmatpush1.msra.mxu0 %v603
  %680 = vmatprep.subr.mxu0 0.0
  %681 = vmatpush1.msra.mxu0 %v602
  %682 = vmatprep.subr.mxu0 0.0
  %683 = vmatpush2.msra.mxu0 %v633
  %684 = vmatprep.subr.mxu0 0.0
  %685 = vmatpush2.msra.mxu0 %v632
  %686 = vmatprep.subr.mxu0 0.0
  %687 = vmatpush2.msra.mxu0 %v631
  %688 = vmatprep.subr.mxu0 0.0
  %689 = vmatpush2.msra.mxu0 %v630
  %690 = vmatprep.subr.mxu0 0.0
  %691 = vmatpush2.msra.mxu0 %v629
  %692 = vmatprep.subr.mxu0 0.0
  %693 = vmatpush2.msra.mxu0 %v628
  %694 = vmatprep.subr.mxu0 0.0
  %695 = vmatpush2.msra.mxu0 %v627
  %696 = vmatprep.subr.mxu0 0.0
  %697 = vmatpush2.msra.mxu0 %v626
  %698 = vmatprep.subr.mxu0 0.0
  %699 = vmatpush2.msra.mxu0 %v625
  %700 = vmatprep.subr.mxu0 0.0
  %701 = vmatpush2.msra.mxu0 %v624
  %702 = vmatprep.subr.mxu0 0.0
  %703 = vmatpush2.msra.mxu0 %v623
  %704 = vmatprep.subr.mxu0 0.0
  %705 = vmatpush2.msra.mxu0 %v622
  %706 = vmatprep.subr.mxu0 0.0
  %707 = vmatpush2.msra.mxu0 %v621
  %708 = vmatprep.subr.mxu0 0.0
  %709 = vmatpush2.msra.mxu0 %v620
  %710 = vmatprep.subr.mxu0 0.0
  %711 = vmatpush2.msra.mxu0 %v619
  %712 = vmatprep.subr.mxu0 0.0
  %713 = vmatpush2.msra.mxu0 %v618
  %714 = vmatprep.mubr.f32.mxu0 %v576
  %715 = vmatmul.mubr.f32.gmra.mxu0 %v566
  %v716 = vpop.f32.mrf.mxu0
  %v717 = vadd.f32 0.0, %v716
  %v718 = vpop.f32.mrf.mxu0
  %719 = vmatprep.mubr.f32.mxu0 %v578
  %720 = vmatmul.mubr.f32.gmra.mxu0 %v556
  %v721 = vpop.f32.mrf.mxu0
  %v722 = vadd.f32 0.0, %v721
  %v723 = vpop.f32.mrf.mxu0
  %724 = vmatprep.mubr.f32.mxu0 %v581
  %725 = vmatmul.mubr.f32.gmra.mxu0 %v567
  %v726 = vpop.f32.mrf.mxu0
  %v727 = vadd.f32 0.0, %v726
  %v728 = vpop.f32.mrf.mxu0
  %729 = vmatprep.mubr.f32.mxu0 %v583
  %730 = vmatmul.mubr.f32.gmra.mxu0 %v559
  %v731 = vpop.f32.mrf.mxu0
  %v732 = vadd.f32 0.0, %v731
  %v733 = vpop.f32.mrf.mxu0
  %734 = vdwg.mxu0
  %735 = vmatprep.subr.mxu0 0.0
  %736 = vmatpush1.msra.mxu0 %v649
  %737 = vmatprep.subr.mxu0 0.0
  %738 = vmatpush1.msra.mxu0 %v648
  %739 = vmatprep.subr.mxu0 0.0
  %740 = vmatpush1.msra.mxu0 %v647
  %741 = vmatprep.subr.mxu0 0.0
  %742 = vmatpush1.msra.mxu0 %v646
  %743 = vmatprep.subr.mxu0 0.0
  %744 = vmatpush1.msra.mxu0 %v645
  %745 = vmatprep.subr.mxu0 0.0
  %746 = vmatpush1.msra.mxu0 %v644
  %747 = vmatprep.subr.mxu0 0.0
  %748 = vmatpush1.msra.mxu0 %v643
  %749 = vmatprep.subr.mxu0 0.0
  %750 = vmatpush1.msra.mxu0 %v642
  %751 = vmatprep.subr.mxu0 0.0
  %752 = vmatpush1.msra.mxu0 %v641
  %753 = vmatprep.subr.mxu0 0.0
  %754 = vmatpush1.msra.mxu0 %v640
  %755 = vmatprep.subr.mxu0 0.0
  %756 = vmatpush1.msra.mxu0 %v639
  %757 = vmatprep.subr.mxu0 0.0
  %758 = vmatpush1.msra.mxu0 %v638
  %759 = vmatprep.subr.mxu0 0.0
  %760 = vmatpush1.msra.mxu0 %v637
  %761 = vmatprep.subr.mxu0 0.0
  %762 = vmatpush1.msra.mxu0 %v636
  %763 = vmatprep.subr.mxu0 0.0
  %764 = vmatpush1.msra.mxu0 %v635
  %765 = vmatprep.subr.mxu0 0.0
  %766 = vmatpush1.msra.mxu0 %v634
  %767 = vmatprep.subr.mxu0 0.0
  %768 = vmatpush2.msra.mxu0 0.0
  %769 = vmatprep.subr.mxu0 0.0
  %770 = vmatpush2.msra.mxu0 0.0
  %771 = vmatprep.subr.mxu0 0.0
  %772 = vmatpush2.msra.mxu0 0.0
  %773 = vmatprep.subr.mxu0 0.0
  %774 = vmatpush2.msra.mxu0 0.0
  %775 = vmatprep.subr.mxu0 0.0
  %776 = vmatpush2.msra.mxu0 0.0
  %777 = vmatprep.subr.mxu0 0.0
  %778 = vmatpush2.msra.mxu0 0.0
  %779 = vmatprep.subr.mxu0 0.0
  %780 = vmatpush2.msra.mxu0 0.0
  %781 = vmatprep.subr.mxu0 0.0
  %782 = vmatpush2.msra.mxu0 0.0
  %783 = vmatprep.subr.mxu0 0.0
  %784 = vmatpush2.msra.mxu0 0.0
  %785 = vmatprep.subr.mxu0 0.0
  %786 = vmatpush2.msra.mxu0 0.0
  %787 = vmatprep.subr.mxu0 0.0
  %788 = vmatpush2.msra.mxu0 0.0
  %789 = vmatprep.subr.mxu0 0.0
  %790 = vmatpush2.msra.mxu0 0.0
  %791 = vmatprep.subr.mxu0 0.0
  %792 = vmatpush2.msra.mxu0 0.0
  %793 = vmatprep.subr.mxu0 0.0
  %794 = vmatpush2.msra.mxu0 0.0
  %795 = vmatprep.subr.mxu0 0.0
  %796 = vmatpush2.msra.mxu0 0.0
  %797 = vmatprep.subr.mxu0 0.0
  %798 = vmatpush2.msra.mxu0 0.0
  %799 = vmatprep.mubr.f32.mxu0 0.0
  %800 = vmatmul.mubr.f32.gmra.mxu0 %v590
  %v801 = vpop.f32.mrf.mxu0
  %v802 = vadd.f32 %v717, %v801
  %v803 = vpop.f32.mrf.mxu0
  %804 = vmatprep.mubr.f32.mxu0 0.0
  %805 = vmatmul.mubr.f32.gmra.mxu0 %v592
  %v806 = vpop.f32.mrf.mxu0
  %v807 = vadd.f32 %v722, %v806
  %v808 = vpop.f32.mrf.mxu0
  %809 = vmatprep.mubr.f32.mxu0 0.0
  %810 = vmatmul.mubr.f32.gmra.mxu0 %v595
  %v811 = vpop.f32.mrf.mxu0
  %v812 = vadd.f32 %v727, %v811
  %v813 = vpop.f32.mrf.mxu0
  %814 = vmatprep.mubr.f32.mxu0 0.0
  %815 = vmatmul.mubr.f32.gmra.mxu0 %v597
  %v816 = vpop.f32.mrf.mxu0
  %v817 = vadd.f32 %v732, %v816
  %v818 = vpop.f32.mrf.mxu0
  %819 = vdwg.mxu0
  %v820 = vadd.f32 %v802, %v807
  %v821 = vadd.f32 %v820, %v812
  %v822 = vadd.f32 %v821, %v817
  %v823 = vrot.slane %v822, 4
  %v824 = vadd.f32 %v822, %v823
  %v825 = vrot.slane %v824, 2
  %v826 = vadd.f32 %v824, %v825
  %v827 = vrot.slane %v826, 1
  %v828 = vadd.f32 %v826, %v827
  %v829 = vmul.f32 %v802, %v802
  %v830 = vmul.f32 %v807, %v807
  %v831 = vmul.f32 %v812, %v812
  %v832 = vmul.f32 %v817, %v817
  %v833 = vadd.f32 %v829, %v830
  %v834 = vadd.f32 %v833, %v831
  %v835 = vadd.f32 %v834, %v832
  %v836 = vrot.slane %v835, 4
  %v837 = vadd.f32 %v835, %v836
  %v838 = vrot.slane %v837, 2
  %v839 = vadd.f32 %v837, %v838
  %v840 = vrot.slane %v839, 1
  %v841 = vadd.f32 %v839, %v840
  %v842 = vsel %vm57, %v828, %v841
  %843 = vmatprep.subr.mxu0 0.0
  %844 = vmatpush1.msra.mxu0 %v47
  %845 = vmatprep.subr.mxu0 0.0
  %846 = vmatpush1.msra.mxu0 %v46
  %847 = vmatprep.subr.mxu0 0.0
  %848 = vmatpush1.msra.mxu0 %v45
  %849 = vmatprep.subr.mxu0 0.0
  %850 = vmatpush1.msra.mxu0 %v44
  %851 = vmatprep.subr.mxu0 0.0
  %852 = vmatpush1.msra.mxu0 %v43
  %853 = vmatprep.subr.mxu0 0.0
  %854 = vmatpush1.msra.mxu0 %v42
  %855 = vmatprep.subr.mxu0 0.0
  %856 = vmatpush1.msra.mxu0 %v41
  %857 = vmatprep.subr.mxu0 0.0
  %858 = vmatpush1.msra.mxu0 %v40
  %859 = vmatprep.subr.mxu0 0.0
  %860 = vmatpush1.msra.mxu0 %v39
  %861 = vmatprep.subr.mxu0 0.0
  %862 = vmatpush1.msra.mxu0 %v38
  %863 = vmatprep.subr.mxu0 0.0
  %864 = vmatpush1.msra.mxu0 %v37
  %865 = vmatprep.subr.mxu0 0.0
  %866 = vmatpush1.msra.mxu0 %v36
  %867 = vmatprep.subr.mxu0 0.0
  %868 = vmatpush1.msra.mxu0 %v35
  %869 = vmatprep.subr.mxu0 0.0
  %870 = vmatpush1.msra.mxu0 %v34
  %871 = vmatprep.subr.mxu0 0.0
  %872 = vmatpush1.msra.mxu0 %v33
  %873 = vmatprep.subr.mxu0 0.0
  %874 = vmatpush1.msra.mxu0 %v32
  %875 = vmatprep.subr.mxu0 0.0
  %876 = vmatpush2.msra.mxu0 0.0
  %877 = vmatprep.subr.mxu0 0.0
  %878 = vmatpush2.msra.mxu0 0.0
  %879 = vmatprep.subr.mxu0 0.0
  %880 = vmatpush2.msra.mxu0 0.0
  %881 = vmatprep.subr.mxu0 0.0
  %882 = vmatpush2.msra.mxu0 0.0
  %883 = vmatprep.subr.mxu0 0.0
  %884 = vmatpush2.msra.mxu0 0.0
  %885 = vmatprep.subr.mxu0 0.0
  %886 = vmatpush2.msra.mxu0 0.0
  %887 = vmatprep.subr.mxu0 0.0
  %888 = vmatpush2.msra.mxu0 0.0
  %889 = vmatprep.subr.mxu0 0.0
  %890 = vmatpush2.msra.mxu0 0.0
  %891 = vmatprep.subr.mxu0 0.0
  %892 = vmatpush2.msra.mxu0 0.0
  %893 = vmatprep.subr.mxu0 0.0
  %894 = vmatpush2.msra.mxu0 0.0
  %895 = vmatprep.subr.mxu0 0.0
  %896 = vmatpush2.msra.mxu0 0.0
  %897 = vmatprep.subr.mxu0 0.0
  %898 = vmatpush2.msra.mxu0 0.0
  %899 = vmatprep.subr.mxu0 0.0
  %900 = vmatpush2.msra.mxu0 0.0
  %901 = vmatprep.subr.mxu0 0.0
  %902 = vmatpush2.msra.mxu0 0.0
  %903 = vmatprep.subr.mxu0 0.0
  %904 = vmatpush2.msra.mxu0 0.0
  %905 = vmatprep.subr.mxu0 0.0
  %906 = vmatpush2.msra.mxu0 0.0
  %907 = vmatprep.mubr.f32.mxu0 0.0
  %908 = vmatmul.mubr.f32.gmra.mxu0 %v842
  %v909 = vpop.f32.mrf.mxu0
  %v910 = vadd.f32 0.0, %v909
  %v911 = vpop.f32.mrf.mxu0
  %912 = vdwg.mxu0
  %v913 = vmul.f32 %v910, 0.001953125
  %v914 = vmul.f32 %v913, %v913
  %v916 = vrot.slane %v914, 7
  %v918 = vsub.f32 %v913, %v916
  %v919 = vld [vmem:[%s5] sm:$0x1]
  %v920 = vadd.f32 %v918, 1e-05
  %v921 = vrsqrt.pop %v920
  %v924 = vunpack.c.l.s4 1966171168
  %v925 = vunpack.c.0.s8 %v924
  %v926 = vlaneseq
  %v927 = vshrl.u32 %v926, 7
  %v928 = vsub.s32 %v925, %v927
  %v929 = vrot.slane %v921, %v928
  %v930 = vcombine.high %v929, %v929
  %v932 = vunpack.c.l.s4 1966171168
  %v933 = vunpack.c.0.s8 %v932
  %v934 = vlaneseq
  %v935 = vshrl.u32 %v934, 7
  %v936 = vsub.s32 %v933, %v935
  %v937 = vrot.slane %v930, %v936
  %v939 = vmul.f32 %v919, %v937
  %v940 = vld [vmem:[%s6] sm:$0x1]
  %v941 = vmul.f32 %v913, %v939
  %v942 = vsub.f32 %v940, %v941
  %v944 = vlaneseq
  %v945 = vshrl.u32 %v944, 7
  %v946 = vsub.s32 0, %v945
  %v947 = vrot.slane %v942, %v946
  %v949 = vsel %vm57, %v939, %v947
  %v951 = vsel %vm456, %v949, 0
  %953 = vmatprep.subr.mxu0 0.0
  %954 = vmatpush1.msra.mxu0 0.0
  %955 = vmatprep.subr.mxu0 0.0
  %956 = vmatpush1.msra.mxu0 0.0
  %957 = vmatprep.subr.mxu0 0.0
  %958 = vmatpush1.msra.mxu0 0.0
  %959 = vmatprep.subr.mxu0 0.0
  %960 = vmatpush1.msra.mxu0 0.0
  %961 = vmatprep.subr.mxu0 0.0
  %962 = vmatpush1.msra.mxu0 0.0
  %963 = vmatprep.subr.mxu0 0.0
  %964 = vmatpush1.msra.mxu0 0.0
  %965 = vmatprep.subr.mxu0 0.0
  %966 = vmatpush1.msra.mxu0 0.0
  %967 = vmatprep.subr.mxu0 0.0
  %968 = vmatpush1.msra.mxu0 0.0
  %969 = vmatprep.subr.mxu0 0.0
  %970 = vmatpush1.msra.mxu0 0.0
  %971 = vmatprep.subr.mxu0 0.0
  %972 = vmatpush1.msra.mxu0 0.0
  %973 = vmatprep.subr.mxu0 0.0
  %974 = vmatpush1.msra.mxu0 0.0
  %975 = vmatprep.subr.mxu0 0.0
  %976 = vmatpush1.msra.mxu0 0.0
  %977 = vmatprep.subr.mxu0 0.0
  %978 = vmatpush1.msra.mxu0 0.0
  %979 = vmatprep.subr.mxu0 0.0
  %980 = vmatpush1.msra.mxu0 0.0
  %981 = vmatprep.subr.mxu0 0.0
  %982 = vmatpush1.msra.mxu0 0.0
  %983 = vmatprep.subr.mxu0 0.0
  %984 = vmatpush1.msra.mxu0 %v48
  %985 = vmatprep.subr.mxu0 0.0
  %986 = vmatpush2.msra.mxu0 0.0
  %987 = vmatprep.subr.mxu0 0.0
  %988 = vmatpush2.msra.mxu0 0.0
  %989 = vmatprep.subr.mxu0 0.0
  %990 = vmatpush2.msra.mxu0 0.0
  %991 = vmatprep.subr.mxu0 0.0
  %992 = vmatpush2.msra.mxu0 0.0
  %993 = vmatprep.subr.mxu0 0.0
  %994 = vmatpush2.msra.mxu0 0.0
  %995 = vmatprep.subr.mxu0 0.0
  %996 = vmatpush2.msra.mxu0 0.0
  %997 = vmatprep.subr.mxu0 0.0
  %998 = vmatpush2.msra.mxu0 0.0
  %999 = vmatprep.subr.mxu0 0.0
  %1000 = vmatpush2.msra.mxu0 0.0
  %1001 = vmatprep.subr.mxu0 0.0
  %1002 = vmatpush2.msra.mxu0 0.0
  %1003 = vmatprep.subr.mxu0 0.0
  %1004 = vmatpush2.msra.mxu0 0.0
  %1005 = vmatprep.subr.mxu0 0.0
  %1006 = vmatpush2.msra.mxu0 0.0
  %1007 = vmatprep.subr.mxu0 0.0
  %1008 = vmatpush2.msra.mxu0 0.0
  %1009 = vmatprep.subr.mxu0 0.0
  %1010 = vmatpush2.msra.mxu0 0.0
  %1011 = vmatprep.subr.mxu0 0.0
  %1012 = vmatpush2.msra.mxu0 0.0
  %1013 = vmatprep.subr.mxu0 0.0
  %1014 = vmatpush2.msra.mxu0 0.0
  %1015 = vmatprep.subr.mxu0 0.0
  %1016 = vmatpush2.msra.mxu0 0.0
  %1017 = vmatprep.mubr.f32.mxu0 0.0
  %1018 = vmatmul.mubr.f32.gmra.mxu0 %v951
  %v1019 = vpop.f32.mrf.mxu0
  %v1020 = vadd.f32 0.0, %v1019
  %v1021 = vpop.f32.mrf.mxu0
  %1022 = vdwg.mxu0
  %v1023 = vlaneseq
  %v1024 = vshrl.u32 %v1023, 7
  %v1025 = vsub.s32 0, %v1024
  %v1026 = vrot.slane %v1020, %v1025
  %v1027 = vmul.f32 %v802, %v1026
  %v1028 = vmul.f32 %v807, %v1026
  %v1029 = vmul.f32 %v812, %v1026
  %v1030 = vmul.f32 %v817, %v1026
  %v1031 = vlaneseq
  %v1032 = vshrl.u32 %v1031, 7
  %v1033 = vsub.s32 1, %v1032
  %v1034 = vrot.slane %v1020, %v1033
  %v1035 = vadd.f32 %v1027, %v1034
  %v1036 = vadd.f32 %v1028, %v1034
  %v1037 = vadd.f32 %v1029, %v1034
  %v1038 = vadd.f32 %v1030, %v1034
  %v1039 = vmax.f32 %v1035, 0.0
  %v1040 = vmax.f32 %v1036, 0.0
  %v1041 = vmax.f32 %v1037, 0.0
  %v1042 = vmax.f32 %v1038, 0.0
  %1043 = vst [vmem:[%s9] sm:$0xff] %v1039
  %1044 = vst [vmem:[%s9 + $0x8] sm:$0xff] %v1040
  %1045 = vst [vmem:[%s9 + $0x10] sm:$0xff] %v1041
  %1046 = vst [vmem:[%s9 + $0x18] sm:$0xff] %v1042
  // Predicated region
  $region38: #{double_conv.1} parent=0 // pred_check
    _
  $region39: #{double_conv.1} parent=0 // pred_check_branch
    %1048 = sbr.rel (0) target = $region41
  $region40: #{double_conv.1} parent=0 // pred_region
    _
  $region41: #{double_conv.1} parent=0 // pred_fallthru
    _
  // Predicated region
  $region42: #{double_conv.1} parent=0 // pred_check
    _
  $region43: #{double_conv.1} parent=0 // pred_check_branch
    %1050 = sbr.rel (0) target = $region45
  $region44: #{double_conv.1} parent=0 // pred_region
    _
  $region45: #{double_conv.1} parent=0 // pred_fallthru
    _

</llo_original>
